<compile_context>
chip_gen: v7x
topology: tpu7x:2x2x1
jax: 0.10.0
libtpu: 0.0.40
codegen_flags: <defaults>
</compile_context>

<pallas_src>
import jax
import jax.numpy as jnp
from jax.experimental import pallas as pl
from jax.experimental.pallas import tpu as pltpu

# ---- problem sizes (small, consistent with the module) ----
B      = 2     # batch
C_IN   = 4     # inp_channels
C_OUT  = 32    # out_channels (divisible by 8 for GroupNorm(8, .))
H      = 16    # horizon
E      = 32    # embed_dim
K      = 5     # kernel_size
PAD    = K // 2
G      = 8     # GroupNorm groups
EPS    = 1e-5

HP = H + 2 * PAD      # per-batch padded horizon
W  = B * HP           # folded lane width (batches side by side, pads kept)


def _mish_ref(z):
    return z * jnp.tanh(jnp.logaddexp(z, 0.0))


def _residual_temporal_block_kernel(
    slab1_ref,   # [K*C_IN, W]   conv1 im2col slab (wrapper-built)
    xp_ref,      # [C_IN, W]     per-batch padded x, batches folded on lanes
    t_ref,       # [E, B]        time embedding, pre-transposed
    w1_ref,      # [C_OUT, K*C_IN]
    w2_ref,      # [C_OUT, K*C_OUT]
    wt_ref,      # [C_OUT, E]    time Linear weight, pre-transposed
    wres_ref,    # [C_OUT, C_IN]
    vec_ref,     # [C_OUT, 8]    columns: b1 g1 be1 b2 g2 be2 bt bres
    o_ref,       # [C_OUT, W]    output in folded/padded layout
):
    f32 = jnp.float32

    # ---- constant selector fields built in registers (no extra DMA) ----
    colf = jax.lax.broadcasted_iota(jnp.int32, (1, W), 1).astype(f32)
    batch_of_col = jnp.floor(colf / HP)                                   # [1, W]
    local = colf - batch_of_col * HP
    mask = jnp.where((local >= PAD) & (local < PAD + H), 1.0, 0.0)        # real columns

    rg = jnp.floor(
        jax.lax.broadcasted_iota(jnp.int32, (C_OUT, C_OUT), 0).astype(f32) / (C_OUT // G))
    cg = jnp.floor(
        jax.lax.broadcasted_iota(jnp.int32, (C_OUT, C_OUT), 1).astype(f32) / (C_OUT // G))
    pmat = jnp.where(rg == cg, 1.0, 0.0)                                  # same-group matrix

    batch_masks = [jnp.where(batch_of_col == b, 1.0, 0.0) for b in range(B)]
    inv_n = 1.0 / ((C_OUT // G) * H)

    # packed per-channel parameter columns
    b1, g1, be1 = vec_ref[:, 0:1], vec_ref[:, 1:2], vec_ref[:, 2:3]
    b2, g2, be2 = vec_ref[:, 3:4], vec_ref[:, 4:5], vec_ref[:, 5:6]
    bt, bres    = vec_ref[:, 6:7], vec_ref[:, 7:8]

    def lane_sum_per_batch(v):
        # v: [C, W] with zeros at pad columns -> per-batch lane sums broadcast back
        out = jnp.zeros_like(v)
        for bm in batch_masks:                      # B=2, static unroll
            s = jnp.sum(v * bm, axis=1, keepdims=True)      # [C, 1]  (XLU reduce)
            out = out + s * bm
        return out

    def group_norm(y, gamma, beta):
        ym = y * mask
        mean = jnp.dot(pmat, lane_sum_per_batch(ym),
                       preferred_element_type=f32) * inv_n
        d = y - mean
        dm = d * mask
        var = jnp.dot(pmat, lane_sum_per_batch(dm * dm),
                      preferred_element_type=f32) * inv_n
        return d * jax.lax.rsqrt(var + EPS) * gamma + beta

    def mish(z):
        # z * tanh(softplus(z)) with a single exp (clamp is exact: ratio==1 beyond 20)
        p = jnp.exp(jnp.minimum(z, 20.0)) + 1.0
        p = p * p
        return z * (p - 1.0) / (p + 1.0)

    # ---- block 0: Conv1d(C_IN -> C_OUT, K) as ONE im2col matmul + GroupNorm + Mish
    h = jnp.dot(w1_ref[...], slab1_ref[...], preferred_element_type=f32) + b1
    h = mish(group_norm(h, g1, be1))

    # ---- time mlp: Mish -> Linear(E -> C_OUT), broadcast over each batch's horizon
    tfeat = jnp.dot(wt_ref[...], mish(t_ref[...]),
                    preferred_element_type=f32) + bt                      # [C_OUT, B]
    tlanes = jnp.zeros((C_OUT, W), f32)
    for b in range(B):
        tlanes = tlanes + tfeat[:, b:b + 1] * batch_masks[b]
    h = (h + tlanes) * mask        # zero the pad columns -> correct conv2 zero-padding

    # ---- block 1: Conv1d(C_OUT -> C_OUT, K) via in-register im2col + GroupNorm + Mish
    zpad = jnp.zeros((C_OUT, PAD), f32)
    hpad = jnp.concatenate([zpad, h, zpad], axis=1)                       # [C_OUT, W+2*PAD]
    slab2 = jnp.concatenate([hpad[:, s:s + W] for s in range(K)], axis=0)  # [K*C_OUT, W]
    h2 = jnp.dot(w2_ref[...], slab2, preferred_element_type=f32) + b2
    h2 = mish(group_norm(h2, g2, be2))

    # ---- residual 1x1 conv on the original x (pad columns discarded by the wrapper)
    res = jnp.dot(wres_ref[...], xp_ref[...], preferred_element_type=f32) + bres

    o_ref[...] = (h2 + res).astype(o_ref.dtype)


def residual_temporal_block(x, t, params):
    """x: [B, C_IN, H], t: [B, E] -> [B, C_OUT, H]."""
    # --- free wrapper-side layout plumbing (XLA) ---
    x_pad = jnp.pad(x, ((0, 0), (0, 0), (PAD, PAD)))                      # [B, C_IN, HP]
    x_packed = jnp.transpose(x_pad, (1, 0, 2)).reshape(C_IN, W)           # [C_IN, W]
    xpp = jnp.pad(x_packed, ((0, 0), (PAD, PAD)))                         # [C_IN, W+2*PAD]
    slab1 = jnp.concatenate([xpp[:, s:s + W] for s in range(K)], axis=0)  # [K*C_IN, W]

    w1f = jnp.transpose(params["w1"], (1, 0, 2)).reshape(C_OUT, K * C_IN)
    w2f = jnp.transpose(params["w2"], (1, 0, 2)).reshape(C_OUT, K * C_OUT)
    wtT = params["wt"].T                                                  # [C_OUT, E]
    t_eb = t.T                                                            # [E, B]
    vecs = jnp.concatenate(
        [params["b1"], params["g1"], params["be1"],
         params["b2"], params["g2"], params["be2"],
         params["bt"].T, params["bres"]], axis=1)                         # [C_OUT, 8]

    full = lambda shape: pl.BlockSpec(shape, lambda i: (0,) * len(shape))

    out_packed = pl.pallas_call(
        _residual_temporal_block_kernel,
        out_shape=jax.ShapeDtypeStruct((C_OUT, W), jnp.float32),
        grid=(1,),                      # whole problem in one step: no per-step overhead
        in_specs=[
            full((K * C_IN, W)),        # slab1
            full((C_IN, W)),            # x_packed
            full((E, B)),               # t (transposed)
            full((C_OUT, K * C_IN)),    # w1 packed
            full((C_OUT, K * C_OUT)),   # w2 packed
            full((C_OUT, E)),           # time Linear weight (transposed)
            full((C_OUT, C_IN)),        # residual conv weight
            full((C_OUT, 8)),           # packed per-channel vectors
        ],
        out_specs=full((C_OUT, W)),
        compiler_params=pltpu.CompilerParams(
            dimension_semantics=("arbitrary",)),
    )(slab1, x_packed, t_eb, w1f, w2f, wtT, params["wres"], vecs)

    # unpack folded/padded layout -> [B, C_OUT, H]
    out = out_packed.reshape(C_OUT, B, HP)[:, :, PAD:PAD + H]
    return jnp.transpose(out, (1, 0, 2))


# ------------------------- pure-JAX reference -------------------------
def _ref_forward(x, t, p):
    def conv1d(xx, w, b, pad):
        y = jax.lax.conv_general_dilated(
            xx, w, window_strides=(1,), padding=[(pad, pad)],
            dimension_numbers=("NCH", "OIH", "NCH"))
        return y + b[None, :, None]

    def gn(y, gamma, beta):
        Bb, C, Hh = y.shape
        yg = y.reshape(Bb, G, (C // G) * Hh)
        m = yg.mean(-1, keepdims=True)
        v = ((yg - m) ** 2).mean(-1, keepdims=True)
        yn = ((yg - m) / jnp.sqrt(v + EPS)).reshape(Bb, C, Hh)
        return yn * gamma[None, :, None] + beta[None, :, None]

    w1 = jnp.transpose(p["w1"], (1, 2, 0))     # [C_OUT, C_IN, K]
    w2 = jnp.transpose(p["w2"], (1, 2, 0))     # [C_OUT, C_OUT, K]

    out = _mish_ref(gn(conv1d(x, w1, p["b1"][:, 0], PAD), p["g1"][:, 0], p["be1"][:, 0]))
    tfeat = _mish_ref(t) @ p["wt"] + p["bt"][0]
    out = out + tfeat[:, :, None]
    out = _mish_ref(gn(conv1d(out, w2, p["b2"][:, 0], PAD), p["g2"][:, 0], p["be2"][:, 0]))
    res = conv1d(x, p["wres"][:, :, None], p["bres"][:, 0], 0)
    return out + res


def _init_params(key):
    ks = jax.random.split(key, 10)
    return {
        "w1":   0.1 * jax.random.normal(ks[0], (K, C_OUT, C_IN), jnp.float32),
        "b1":   0.1 * jax.random.normal(ks[1], (C_OUT, 1), jnp.float32),
        "g1":   jnp.ones((C_OUT, 1), jnp.float32),
        "be1":  jnp.zeros((C_OUT, 1), jnp.float32),
        "w2":   0.1 * jax.random.normal(ks[2], (K, C_OUT, C_OUT), jnp.float32),
        "b2":   0.1 * jax.random.normal(ks[3], (C_OUT, 1), jnp.float32),
        "g2":   1.0 + 0.05 * jax.random.normal(ks[4], (C_OUT, 1), jnp.float32),
        "be2":  0.05 * jax.random.normal(ks[5], (C_OUT, 1), jnp.float32),
        "wt":   0.1 * jax.random.normal(ks[6], (E, C_OUT), jnp.float32),
        "bt":   0.1 * jax.random.normal(ks[7], (1, C_OUT), jnp.float32),
        "wres": 0.1 * jax.random.normal(ks[8], (C_OUT, C_IN), jnp.float32),
        "bres": 0.1 * jax.random.normal(ks[9], (C_OUT, 1), jnp.float32),
    }


if __name__ == "__main__":
    key = jax.random.PRNGKey(0)
    kx, kt, kp = jax.random.split(key, 3)
    x = jax.random.normal(kx, (B, C_IN, H), jnp.float32)
    t = jax.random.normal(kt, (B, E), jnp.float32)
    cond = jnp.zeros((B, E), jnp.float32)  # unused by forward(); kept for signature parity
    params = _init_params(kp)

    out = residual_temporal_block(x, t, params)
    out = jax.block_until_ready(out)

    ref = _ref_forward(x, t, params)
    assert out.shape == (B, C_OUT, H)
    assert jnp.allclose(out, ref, rtol=1e-4, atol=1e-4), float(jnp.max(jnp.abs(out - ref)))

    print("KERNEL_OK")
</pallas_src>

<mosaic_0001>
module attributes {stable_mosaic.version = 11 : i64} {
  func.func @_residual_temporal_block_kernel(%arg0: i32, %arg1: memref<20x40xf32, #tpu.memory_space<vmem>>, %arg2: memref<4x40xf32, #tpu.memory_space<vmem>>, %arg3: memref<32x2xf32, #tpu.memory_space<vmem>>, %arg4: memref<32x20xf32, #tpu.memory_space<vmem>>, %arg5: memref<32x160xf32, #tpu.memory_space<vmem>>, %arg6: memref<32x32xf32, #tpu.memory_space<vmem>>, %arg7: memref<32x4xf32, #tpu.memory_space<vmem>>, %arg8: memref<32x8xf32, #tpu.memory_space<vmem>>, %arg9: memref<32x40xf32, #tpu.memory_space<vmem>>) attributes {dimension_semantics = [#tpu.dimension_semantics<arbitrary>], iteration_bounds = array<i64: 1>, scalar_prefetch = 0 : i64, scratch_operands = 0 : i64, tpu.core_type = #tpu.core_type<tc>, window_params = [{pipeline_mode = #tpu.pipeline_mode<synchronous>, transform_indices = @transform_0, window_bounds = array<i64: 20, 40>}, {pipeline_mode = #tpu.pipeline_mode<synchronous>, transform_indices = @transform_1, window_bounds = array<i64: 4, 40>}, {pipeline_mode = #tpu.pipeline_mode<synchronous>, transform_indices = @transform_2, window_bounds = array<i64: 32, 2>}, {pipeline_mode = #tpu.pipeline_mode<synchronous>, transform_indices = @transform_3, window_bounds = array<i64: 32, 20>}, {pipeline_mode = #tpu.pipeline_mode<synchronous>, transform_indices = @transform_4, window_bounds = array<i64: 32, 160>}, {pipeline_mode = #tpu.pipeline_mode<synchronous>, transform_indices = @transform_5, window_bounds = array<i64: 32, 32>}, {pipeline_mode = #tpu.pipeline_mode<synchronous>, transform_indices = @transform_6, window_bounds = array<i64: 32, 4>}, {pipeline_mode = #tpu.pipeline_mode<synchronous>, transform_indices = @transform_7, window_bounds = array<i64: 32, 8>}, {pipeline_mode = #tpu.pipeline_mode<synchronous>, transform_indices = @transform_8, window_bounds = array<i64: 32, 40>}]} {
    %0 = tpu.iota {dimensions = array<i32: 1>} : vector<1x40xi32>
    %1 = arith.sitofp %0 : vector<1x40xi32> to vector<1x40xf32>
    %cst = arith.constant 2.000000e+01 : f32
    %2 = vector.broadcast %cst : f32 to vector<1x40xf32>
    %3 = arith.divf %1, %2 : vector<1x40xf32>
    %4 = math.floor %3 : vector<1x40xf32>
    %cst_0 = arith.constant 2.000000e+01 : f32
    %5 = vector.broadcast %cst_0 : f32 to vector<1x40xf32>
    %6 = arith.mulf %4, %5 : vector<1x40xf32>
    %7 = arith.subf %1, %6 : vector<1x40xf32>
    %cst_1 = arith.constant 2.000000e+00 : f32
    %8 = vector.broadcast %cst_1 : f32 to vector<1x40xf32>
    %9 = arith.cmpf oge, %7, %8 : vector<1x40xf32>
    %cst_2 = arith.constant 1.800000e+01 : f32
    %10 = vector.broadcast %cst_2 : f32 to vector<1x40xf32>
    %11 = arith.cmpf olt, %7, %10 : vector<1x40xf32>
    %12 = arith.andi %9, %11 : vector<1x40xi1>
    %cst_3 = arith.constant 1.000000e+00 : f32
    %cst_4 = arith.constant 0.000000e+00 : f32
    %13 = vector.broadcast %cst_3 : f32 to vector<1x40xf32>
    %14 = vector.broadcast %cst_4 : f32 to vector<1x40xf32>
    %15 = arith.select %12, %13, %14 : vector<1x40xi1>, vector<1x40xf32>
    %16 = tpu.iota {dimensions = array<i32: 0>} : vector<32x32xi32>
    %17 = arith.sitofp %16 : vector<32x32xi32> to vector<32x32xf32>
    %cst_5 = arith.constant 4.000000e+00 : f32
    %18 = vector.broadcast %cst_5 : f32 to vector<32x32xf32>
    %19 = arith.divf %17, %18 : vector<32x32xf32>
    %20 = math.floor %19 : vector<32x32xf32>
    %21 = tpu.iota {dimensions = array<i32: 1>} : vector<32x32xi32>
    %22 = arith.sitofp %21 : vector<32x32xi32> to vector<32x32xf32>
    %cst_6 = arith.constant 4.000000e+00 : f32
    %23 = vector.broadcast %cst_6 : f32 to vector<32x32xf32>
    %24 = arith.divf %22, %23 : vector<32x32xf32>
    %25 = math.floor %24 : vector<32x32xf32>
    %26 = arith.cmpf oeq, %20, %25 : vector<32x32xf32>
    %cst_7 = arith.constant 1.000000e+00 : f32
    %cst_8 = arith.constant 0.000000e+00 : f32
    %27 = vector.broadcast %cst_7 : f32 to vector<32x32xf32>
    %28 = vector.broadcast %cst_8 : f32 to vector<32x32xf32>
    %29 = arith.select %26, %27, %28 : vector<32x32xi1>, vector<32x32xf32>
    %cst_9 = arith.constant 0.000000e+00 : f32
    %30 = vector.broadcast %cst_9 : f32 to vector<1x40xf32>
    %31 = arith.cmpf oeq, %4, %30 : vector<1x40xf32>
    %cst_10 = arith.constant 1.000000e+00 : f32
    %cst_11 = arith.constant 0.000000e+00 : f32
    %32 = vector.broadcast %cst_10 : f32 to vector<1x40xf32>
    %33 = vector.broadcast %cst_11 : f32 to vector<1x40xf32>
    %34 = arith.select %31, %32, %33 : vector<1x40xi1>, vector<1x40xf32>
    %cst_12 = arith.constant 1.000000e+00 : f32
    %35 = vector.broadcast %cst_12 : f32 to vector<1x40xf32>
    %36 = arith.cmpf oeq, %4, %35 : vector<1x40xf32>
    %cst_13 = arith.constant 1.000000e+00 : f32
    %cst_14 = arith.constant 0.000000e+00 : f32
    %37 = vector.broadcast %cst_13 : f32 to vector<1x40xf32>
    %38 = vector.broadcast %cst_14 : f32 to vector<1x40xf32>
    %39 = arith.select %36, %37, %38 : vector<1x40xi1>, vector<1x40xf32>
    %c0 = arith.constant 0 : index
    %c0_15 = arith.constant 0 : index
    %40 = vector.load %arg8[%c0, %c0_15] : memref<32x8xf32, #tpu.memory_space<vmem>>, vector<32x1xf32>
    %c0_16 = arith.constant 0 : index
    %c1 = arith.constant 1 : index
    %41 = vector.load %arg8[%c0_16, %c1] : memref<32x8xf32, #tpu.memory_space<vmem>>, vector<32x1xf32>
    %c0_17 = arith.constant 0 : index
    %c2 = arith.constant 2 : index
    %42 = vector.load %arg8[%c0_17, %c2] : memref<32x8xf32, #tpu.memory_space<vmem>>, vector<32x1xf32>
    %c0_18 = arith.constant 0 : index
    %c3 = arith.constant 3 : index
    %43 = vector.load %arg8[%c0_18, %c3] : memref<32x8xf32, #tpu.memory_space<vmem>>, vector<32x1xf32>
    %c0_19 = arith.constant 0 : index
    %c4 = arith.constant 4 : index
    %44 = vector.load %arg8[%c0_19, %c4] : memref<32x8xf32, #tpu.memory_space<vmem>>, vector<32x1xf32>
    %c0_20 = arith.constant 0 : index
    %c5 = arith.constant 5 : index
    %45 = vector.load %arg8[%c0_20, %c5] : memref<32x8xf32, #tpu.memory_space<vmem>>, vector<32x1xf32>
    %c0_21 = arith.constant 0 : index
    %c6 = arith.constant 6 : index
    %46 = vector.load %arg8[%c0_21, %c6] : memref<32x8xf32, #tpu.memory_space<vmem>>, vector<32x1xf32>
    %c0_22 = arith.constant 0 : index
    %c7 = arith.constant 7 : index
    %47 = vector.load %arg8[%c0_22, %c7] : memref<32x8xf32, #tpu.memory_space<vmem>>, vector<32x1xf32>
    %c0_23 = arith.constant 0 : index
    %c0_24 = arith.constant 0 : index
    %48 = vector.load %arg4[%c0_23, %c0_24] : memref<32x20xf32, #tpu.memory_space<vmem>>, vector<32x20xf32>
    %c0_25 = arith.constant 0 : index
    %c0_26 = arith.constant 0 : index
    %49 = vector.load %arg1[%c0_25, %c0_26] : memref<20x40xf32, #tpu.memory_space<vmem>>, vector<20x40xf32>
    %cst_27 = arith.constant dense<0.000000e+00> : vector<32x40xf32>
    %50 = tpu.matmul %48, %49, %cst_27 {dimension_numbers = #tpu.dot_dimension_numbers<[1], [0], [0], [1], [0, 0, 1, 1], [], []>} : vector<32x20xf32>, vector<20x40xf32>, vector<32x40xf32> -> vector<32x40xf32>
    %51 = vector.broadcast %40 : vector<32x1xf32> to vector<32x40xf32>
    %52 = arith.addf %50, %51 : vector<32x40xf32>
    %53 = vector.broadcast %15 : vector<1x40xf32> to vector<32x40xf32>
    %54 = arith.mulf %52, %53 : vector<32x40xf32>
    %cst_28 = arith.constant 0.000000e+00 : f32
    %55 = vector.broadcast %cst_28 : f32 to vector<32x40xf32>
    %56 = vector.broadcast %34 : vector<1x40xf32> to vector<32x40xf32>
    %57 = arith.mulf %54, %56 : vector<32x40xf32>
    %cst_29 = arith.constant dense<0.000000e+00> : vector<32xf32>
    %58 = vector.multi_reduction <add>, %57, %cst_29 [1] : vector<32x40xf32> to vector<32xf32>
    %59 = vector.shape_cast %58 : vector<32xf32> to vector<32x1xf32>
    %60 = vector.broadcast %59 : vector<32x1xf32> to vector<32x40xf32>
    %61 = vector.broadcast %34 : vector<1x40xf32> to vector<32x40xf32>
    %62 = arith.mulf %60, %61 : vector<32x40xf32>
    %63 = arith.addf %55, %62 : vector<32x40xf32>
    %64 = vector.broadcast %39 : vector<1x40xf32> to vector<32x40xf32>
    %65 = arith.mulf %54, %64 : vector<32x40xf32>
    %cst_30 = arith.constant dense<0.000000e+00> : vector<32xf32>
    %66 = vector.multi_reduction <add>, %65, %cst_30 [1] : vector<32x40xf32> to vector<32xf32>
    %67 = vector.shape_cast %66 : vector<32xf32> to vector<32x1xf32>
    %68 = vector.broadcast %67 : vector<32x1xf32> to vector<32x40xf32>
    %69 = vector.broadcast %39 : vector<1x40xf32> to vector<32x40xf32>
    %70 = arith.mulf %68, %69 : vector<32x40xf32>
    %71 = arith.addf %63, %70 : vector<32x40xf32>
    %cst_31 = arith.constant dense<0.000000e+00> : vector<32x40xf32>
    %72 = tpu.matmul %29, %71, %cst_31 {dimension_numbers = #tpu.dot_dimension_numbers<[1], [0], [0], [1], [0, 0, 1, 1], [], []>} : vector<32x32xf32>, vector<32x40xf32>, vector<32x40xf32> -> vector<32x40xf32>
    %cst_32 = arith.constant 1.562500e-02 : f32
    %73 = vector.broadcast %cst_32 : f32 to vector<32x40xf32>
    %74 = arith.mulf %72, %73 : vector<32x40xf32>
    %75 = arith.subf %52, %74 : vector<32x40xf32>
    %76 = vector.broadcast %15 : vector<1x40xf32> to vector<32x40xf32>
    %77 = arith.mulf %75, %76 : vector<32x40xf32>
    %78 = arith.mulf %77, %77 : vector<32x40xf32>
    %cst_33 = arith.constant 0.000000e+00 : f32
    %79 = vector.broadcast %cst_33 : f32 to vector<32x40xf32>
    %80 = vector.broadcast %34 : vector<1x40xf32> to vector<32x40xf32>
    %81 = arith.mulf %78, %80 : vector<32x40xf32>
    %cst_34 = arith.constant dense<0.000000e+00> : vector<32xf32>
    %82 = vector.multi_reduction <add>, %81, %cst_34 [1] : vector<32x40xf32> to vector<32xf32>
    %83 = vector.shape_cast %82 : vector<32xf32> to vector<32x1xf32>
    %84 = vector.broadcast %83 : vector<32x1xf32> to vector<32x40xf32>
    %85 = vector.broadcast %34 : vector<1x40xf32> to vector<32x40xf32>
    %86 = arith.mulf %84, %85 : vector<32x40xf32>
    %87 = arith.addf %79, %86 : vector<32x40xf32>
    %88 = vector.broadcast %39 : vector<1x40xf32> to vector<32x40xf32>
    %89 = arith.mulf %78, %88 : vector<32x40xf32>
    %cst_35 = arith.constant dense<0.000000e+00> : vector<32xf32>
    %90 = vector.multi_reduction <add>, %89, %cst_35 [1] : vector<32x40xf32> to vector<32xf32>
    %91 = vector.shape_cast %90 : vector<32xf32> to vector<32x1xf32>
    %92 = vector.broadcast %91 : vector<32x1xf32> to vector<32x40xf32>
    %93 = vector.broadcast %39 : vector<1x40xf32> to vector<32x40xf32>
    %94 = arith.mulf %92, %93 : vector<32x40xf32>
    %95 = arith.addf %87, %94 : vector<32x40xf32>
    %cst_36 = arith.constant dense<0.000000e+00> : vector<32x40xf32>
    %96 = tpu.matmul %29, %95, %cst_36 {dimension_numbers = #tpu.dot_dimension_numbers<[1], [0], [0], [1], [0, 0, 1, 1], [], []>} : vector<32x32xf32>, vector<32x40xf32>, vector<32x40xf32> -> vector<32x40xf32>
    %cst_37 = arith.constant 1.562500e-02 : f32
    %97 = vector.broadcast %cst_37 : f32 to vector<32x40xf32>
    %98 = arith.mulf %96, %97 : vector<32x40xf32>
    %cst_38 = arith.constant 9.99999974E-6 : f32
    %99 = vector.broadcast %cst_38 : f32 to vector<32x40xf32>
    %100 = arith.addf %98, %99 : vector<32x40xf32>
    %101 = math.rsqrt %100 : vector<32x40xf32>
    %102 = arith.mulf %75, %101 : vector<32x40xf32>
    %103 = vector.broadcast %41 : vector<32x1xf32> to vector<32x40xf32>
    %104 = arith.mulf %102, %103 : vector<32x40xf32>
    %105 = vector.broadcast %42 : vector<32x1xf32> to vector<32x40xf32>
    %106 = arith.addf %104, %105 : vector<32x40xf32>
    %cst_39 = arith.constant 2.000000e+01 : f32
    %107 = vector.broadcast %cst_39 : f32 to vector<32x40xf32>
    %108 = arith.minimumf %106, %107 : vector<32x40xf32>
    %109 = math.exp %108 : vector<32x40xf32>
    %cst_40 = arith.constant 1.000000e+00 : f32
    %110 = vector.broadcast %cst_40 : f32 to vector<32x40xf32>
    %111 = arith.addf %109, %110 : vector<32x40xf32>
    %112 = arith.mulf %111, %111 : vector<32x40xf32>
    %cst_41 = arith.constant 1.000000e+00 : f32
    %113 = vector.broadcast %cst_41 : f32 to vector<32x40xf32>
    %114 = arith.subf %112, %113 : vector<32x40xf32>
    %115 = arith.mulf %106, %114 : vector<32x40xf32>
    %cst_42 = arith.constant 1.000000e+00 : f32
    %116 = vector.broadcast %cst_42 : f32 to vector<32x40xf32>
    %117 = arith.addf %112, %116 : vector<32x40xf32>
    %118 = arith.divf %115, %117 : vector<32x40xf32>
    %c0_43 = arith.constant 0 : index
    %c0_44 = arith.constant 0 : index
    %119 = vector.load %arg6[%c0_43, %c0_44] : memref<32x32xf32, #tpu.memory_space<vmem>>, vector<32x32xf32>
    %c0_45 = arith.constant 0 : index
    %c0_46 = arith.constant 0 : index
    %120 = vector.load %arg3[%c0_45, %c0_46] : memref<32x2xf32, #tpu.memory_space<vmem>>, vector<32x2xf32>
    %cst_47 = arith.constant 2.000000e+01 : f32
    %121 = vector.broadcast %cst_47 : f32 to vector<32x2xf32>
    %122 = arith.minimumf %120, %121 : vector<32x2xf32>
    %123 = math.exp %122 : vector<32x2xf32>
    %cst_48 = arith.constant 1.000000e+00 : f32
    %124 = vector.broadcast %cst_48 : f32 to vector<32x2xf32>
    %125 = arith.addf %123, %124 : vector<32x2xf32>
    %126 = arith.mulf %125, %125 : vector<32x2xf32>
    %cst_49 = arith.constant 1.000000e+00 : f32
    %127 = vector.broadcast %cst_49 : f32 to vector<32x2xf32>
    %128 = arith.subf %126, %127 : vector<32x2xf32>
    %129 = arith.mulf %120, %128 : vector<32x2xf32>
    %cst_50 = arith.constant 1.000000e+00 : f32
    %130 = vector.broadcast %cst_50 : f32 to vector<32x2xf32>
    %131 = arith.addf %126, %130 : vector<32x2xf32>
    %132 = arith.divf %129, %131 : vector<32x2xf32>
    %cst_51 = arith.constant dense<0.000000e+00> : vector<32x2xf32>
    %133 = tpu.matmul %119, %132, %cst_51 {dimension_numbers = #tpu.dot_dimension_numbers<[1], [0], [0], [1], [0, 0, 1, 1], [], []>} : vector<32x32xf32>, vector<32x2xf32>, vector<32x2xf32> -> vector<32x2xf32>
    %134 = vector.broadcast %46 : vector<32x1xf32> to vector<32x2xf32>
    %135 = arith.addf %133, %134 : vector<32x2xf32>
    %cst_52 = arith.constant 0.000000e+00 : f32
    %136 = vector.broadcast %cst_52 : f32 to vector<32x40xf32>
    %137 = vector.extract_strided_slice %135 {offsets = [0, 0], sizes = [32, 1], strides = [1, 1]} : vector<32x2xf32> to vector<32x1xf32>
    %138 = vector.broadcast %137 : vector<32x1xf32> to vector<32x40xf32>
    %139 = vector.broadcast %34 : vector<1x40xf32> to vector<32x40xf32>
    %140 = arith.mulf %138, %139 : vector<32x40xf32>
    %141 = arith.addf %136, %140 : vector<32x40xf32>
    %142 = vector.extract_strided_slice %135 {offsets = [0, 1], sizes = [32, 1], strides = [1, 1]} : vector<32x2xf32> to vector<32x1xf32>
    %143 = vector.broadcast %142 : vector<32x1xf32> to vector<32x40xf32>
    %144 = vector.broadcast %39 : vector<1x40xf32> to vector<32x40xf32>
    %145 = arith.mulf %143, %144 : vector<32x40xf32>
    %146 = arith.addf %141, %145 : vector<32x40xf32>
    %147 = arith.addf %118, %146 : vector<32x40xf32>
    %148 = vector.broadcast %15 : vector<1x40xf32> to vector<32x40xf32>
    %149 = arith.mulf %147, %148 : vector<32x40xf32>
    %cst_53 = arith.constant 0.000000e+00 : f32
    %150 = vector.broadcast %cst_53 : f32 to vector<32x2xf32>
    %151 = tpu.concatenate %150, %149, %150 in 1 : vector<32x2xf32>, vector<32x40xf32>, vector<32x2xf32> -> vector<32x44xf32>
    %152 = vector.extract_strided_slice %151 {offsets = [0, 0], sizes = [32, 40], strides = [1, 1]} : vector<32x44xf32> to vector<32x40xf32>
    %153 = vector.extract_strided_slice %151 {offsets = [0, 1], sizes = [32, 40], strides = [1, 1]} : vector<32x44xf32> to vector<32x40xf32>
    %154 = vector.extract_strided_slice %151 {offsets = [0, 2], sizes = [32, 40], strides = [1, 1]} : vector<32x44xf32> to vector<32x40xf32>
    %155 = vector.extract_strided_slice %151 {offsets = [0, 3], sizes = [32, 40], strides = [1, 1]} : vector<32x44xf32> to vector<32x40xf32>
    %156 = vector.extract_strided_slice %151 {offsets = [0, 4], sizes = [32, 40], strides = [1, 1]} : vector<32x44xf32> to vector<32x40xf32>
    %157 = tpu.concatenate %152, %153, %154, %155, %156 in 0 : vector<32x40xf32>, vector<32x40xf32>, vector<32x40xf32>, vector<32x40xf32>, vector<32x40xf32> -> vector<160x40xf32>
    %c0_54 = arith.constant 0 : index
    %c0_55 = arith.constant 0 : index
    %158 = vector.load %arg5[%c0_54, %c0_55] : memref<32x160xf32, #tpu.memory_space<vmem>>, vector<32x160xf32>
    %cst_56 = arith.constant dense<0.000000e+00> : vector<32x40xf32>
    %159 = tpu.matmul %158, %157, %cst_56 {dimension_numbers = #tpu.dot_dimension_numbers<[1], [0], [0], [1], [0, 0, 1, 1], [], []>} : vector<32x160xf32>, vector<160x40xf32>, vector<32x40xf32> -> vector<32x40xf32>
    %160 = vector.broadcast %43 : vector<32x1xf32> to vector<32x40xf32>
    %161 = arith.addf %159, %160 : vector<32x40xf32>
    %162 = vector.broadcast %15 : vector<1x40xf32> to vector<32x40xf32>
    %163 = arith.mulf %161, %162 : vector<32x40xf32>
    %cst_57 = arith.constant 0.000000e+00 : f32
    %164 = vector.broadcast %cst_57 : f32 to vector<32x40xf32>
    %165 = vector.broadcast %34 : vector<1x40xf32> to vector<32x40xf32>
    %166 = arith.mulf %163, %165 : vector<32x40xf32>
    %cst_58 = arith.constant dense<0.000000e+00> : vector<32xf32>
    %167 = vector.multi_reduction <add>, %166, %cst_58 [1] : vector<32x40xf32> to vector<32xf32>
    %168 = vector.shape_cast %167 : vector<32xf32> to vector<32x1xf32>
    %169 = vector.broadcast %168 : vector<32x1xf32> to vector<32x40xf32>
    %170 = vector.broadcast %34 : vector<1x40xf32> to vector<32x40xf32>
    %171 = arith.mulf %169, %170 : vector<32x40xf32>
    %172 = arith.addf %164, %171 : vector<32x40xf32>
    %173 = vector.broadcast %39 : vector<1x40xf32> to vector<32x40xf32>
    %174 = arith.mulf %163, %173 : vector<32x40xf32>
    %cst_59 = arith.constant dense<0.000000e+00> : vector<32xf32>
    %175 = vector.multi_reduction <add>, %174, %cst_59 [1] : vector<32x40xf32> to vector<32xf32>
    %176 = vector.shape_cast %175 : vector<32xf32> to vector<32x1xf32>
    %177 = vector.broadcast %176 : vector<32x1xf32> to vector<32x40xf32>
    %178 = vector.broadcast %39 : vector<1x40xf32> to vector<32x40xf32>
    %179 = arith.mulf %177, %178 : vector<32x40xf32>
    %180 = arith.addf %172, %179 : vector<32x40xf32>
    %cst_60 = arith.constant dense<0.000000e+00> : vector<32x40xf32>
    %181 = tpu.matmul %29, %180, %cst_60 {dimension_numbers = #tpu.dot_dimension_numbers<[1], [0], [0], [1], [0, 0, 1, 1], [], []>} : vector<32x32xf32>, vector<32x40xf32>, vector<32x40xf32> -> vector<32x40xf32>
    %cst_61 = arith.constant 1.562500e-02 : f32
    %182 = vector.broadcast %cst_61 : f32 to vector<32x40xf32>
    %183 = arith.mulf %181, %182 : vector<32x40xf32>
    %184 = arith.subf %161, %183 : vector<32x40xf32>
    %185 = vector.broadcast %15 : vector<1x40xf32> to vector<32x40xf32>
    %186 = arith.mulf %184, %185 : vector<32x40xf32>
    %187 = arith.mulf %186, %186 : vector<32x40xf32>
    %cst_62 = arith.constant 0.000000e+00 : f32
    %188 = vector.broadcast %cst_62 : f32 to vector<32x40xf32>
    %189 = vector.broadcast %34 : vector<1x40xf32> to vector<32x40xf32>
    %190 = arith.mulf %187, %189 : vector<32x40xf32>
    %cst_63 = arith.constant dense<0.000000e+00> : vector<32xf32>
    %191 = vector.multi_reduction <add>, %190, %cst_63 [1] : vector<32x40xf32> to vector<32xf32>
    %192 = vector.shape_cast %191 : vector<32xf32> to vector<32x1xf32>
    %193 = vector.broadcast %192 : vector<32x1xf32> to vector<32x40xf32>
    %194 = vector.broadcast %34 : vector<1x40xf32> to vector<32x40xf32>
    %195 = arith.mulf %193, %194 : vector<32x40xf32>
    %196 = arith.addf %188, %195 : vector<32x40xf32>
    %197 = vector.broadcast %39 : vector<1x40xf32> to vector<32x40xf32>
    %198 = arith.mulf %187, %197 : vector<32x40xf32>
    %cst_64 = arith.constant dense<0.000000e+00> : vector<32xf32>
    %199 = vector.multi_reduction <add>, %198, %cst_64 [1] : vector<32x40xf32> to vector<32xf32>
    %200 = vector.shape_cast %199 : vector<32xf32> to vector<32x1xf32>
    %201 = vector.broadcast %200 : vector<32x1xf32> to vector<32x40xf32>
    %202 = vector.broadcast %39 : vector<1x40xf32> to vector<32x40xf32>
    %203 = arith.mulf %201, %202 : vector<32x40xf32>
    %204 = arith.addf %196, %203 : vector<32x40xf32>
    %cst_65 = arith.constant dense<0.000000e+00> : vector<32x40xf32>
    %205 = tpu.matmul %29, %204, %cst_65 {dimension_numbers = #tpu.dot_dimension_numbers<[1], [0], [0], [1], [0, 0, 1, 1], [], []>} : vector<32x32xf32>, vector<32x40xf32>, vector<32x40xf32> -> vector<32x40xf32>
    %cst_66 = arith.constant 1.562500e-02 : f32
    %206 = vector.broadcast %cst_66 : f32 to vector<32x40xf32>
    %207 = arith.mulf %205, %206 : vector<32x40xf32>
    %cst_67 = arith.constant 9.99999974E-6 : f32
    %208 = vector.broadcast %cst_67 : f32 to vector<32x40xf32>
    %209 = arith.addf %207, %208 : vector<32x40xf32>
    %210 = math.rsqrt %209 : vector<32x40xf32>
    %211 = arith.mulf %184, %210 : vector<32x40xf32>
    %212 = vector.broadcast %44 : vector<32x1xf32> to vector<32x40xf32>
    %213 = arith.mulf %211, %212 : vector<32x40xf32>
    %214 = vector.broadcast %45 : vector<32x1xf32> to vector<32x40xf32>
    %215 = arith.addf %213, %214 : vector<32x40xf32>
    %cst_68 = arith.constant 2.000000e+01 : f32
    %216 = vector.broadcast %cst_68 : f32 to vector<32x40xf32>
    %217 = arith.minimumf %215, %216 : vector<32x40xf32>
    %218 = math.exp %217 : vector<32x40xf32>
    %cst_69 = arith.constant 1.000000e+00 : f32
    %219 = vector.broadcast %cst_69 : f32 to vector<32x40xf32>
    %220 = arith.addf %218, %219 : vector<32x40xf32>
    %221 = arith.mulf %220, %220 : vector<32x40xf32>
    %cst_70 = arith.constant 1.000000e+00 : f32
    %222 = vector.broadcast %cst_70 : f32 to vector<32x40xf32>
    %223 = arith.subf %221, %222 : vector<32x40xf32>
    %224 = arith.mulf %215, %223 : vector<32x40xf32>
    %cst_71 = arith.constant 1.000000e+00 : f32
    %225 = vector.broadcast %cst_71 : f32 to vector<32x40xf32>
    %226 = arith.addf %221, %225 : vector<32x40xf32>
    %227 = arith.divf %224, %226 : vector<32x40xf32>
    %c0_72 = arith.constant 0 : index
    %c0_73 = arith.constant 0 : index
    %228 = vector.load %arg7[%c0_72, %c0_73] : memref<32x4xf32, #tpu.memory_space<vmem>>, vector<32x4xf32>
    %c0_74 = arith.constant 0 : index
    %c0_75 = arith.constant 0 : index
    %229 = vector.load %arg2[%c0_74, %c0_75] : memref<4x40xf32, #tpu.memory_space<vmem>>, vector<4x40xf32>
    %cst_76 = arith.constant dense<0.000000e+00> : vector<32x40xf32>
    %230 = tpu.matmul %228, %229, %cst_76 {dimension_numbers = #tpu.dot_dimension_numbers<[1], [0], [0], [1], [0, 0, 1, 1], [], []>} : vector<32x4xf32>, vector<4x40xf32>, vector<32x40xf32> -> vector<32x40xf32>
    %231 = vector.broadcast %47 : vector<32x1xf32> to vector<32x40xf32>
    %232 = arith.addf %230, %231 : vector<32x40xf32>
    %233 = arith.addf %227, %232 : vector<32x40xf32>
    %c0_77 = arith.constant 0 : index
    %c0_78 = arith.constant 0 : index
    %234 = vector.load %arg9[%c0_77, %c0_78] : memref<32x40xf32, #tpu.memory_space<vmem>>, vector<32x40xf32>
    tpu.vector_store %arg9[%c0_77, %c0_78], %233 {strides = array<i32>} : memref<32x40xf32, #tpu.memory_space<vmem>>, vector<32x40xf32>,
    return
  }
  func.func @transform_0(%arg0: i32) -> (i32, i32) {
    %c0_i32 = arith.constant 0 : i32
    %c0_i32_0 = arith.constant 0 : i32
    %c0_i32_1 = arith.constant 0 : i32
    return %c0_i32, %c0_i32_0 : i32, i32
  }
  func.func @transform_1(%arg0: i32) -> (i32, i32) {
    %c0_i32 = arith.constant 0 : i32
    %c0_i32_0 = arith.constant 0 : i32
    %c0_i32_1 = arith.constant 0 : i32
    return %c0_i32, %c0_i32_0 : i32, i32
  }
  func.func @transform_2(%arg0: i32) -> (i32, i32) {
    %c0_i32 = arith.constant 0 : i32
    %c0_i32_0 = arith.constant 0 : i32
    %c0_i32_1 = arith.constant 0 : i32
    return %c0_i32, %c0_i32_0 : i32, i32
  }
  func.func @transform_3(%arg0: i32) -> (i32, i32) {
    %c0_i32 = arith.constant 0 : i32
    %c0_i32_0 = arith.constant 0 : i32
    %c0_i32_1 = arith.constant 0 : i32
    return %c0_i32, %c0_i32_0 : i32, i32
  }
  func.func @transform_4(%arg0: i32) -> (i32, i32) {
    %c0_i32 = arith.constant 0 : i32
    %c0_i32_0 = arith.constant 0 : i32
    %c0_i32_1 = arith.constant 0 : i32
    return %c0_i32, %c0_i32_0 : i32, i32
  }
  func.func @transform_5(%arg0: i32) -> (i32, i32) {
    %c0_i32 = arith.constant 0 : i32
    %c0_i32_0 = arith.constant 0 : i32
    %c0_i32_1 = arith.constant 0 : i32
    return %c0_i32, %c0_i32_0 : i32, i32
  }
  func.func @transform_6(%arg0: i32) -> (i32, i32) {
    %c0_i32 = arith.constant 0 : i32
    %c0_i32_0 = arith.constant 0 : i32
    %c0_i32_1 = arith.constant 0 : i32
    return %c0_i32, %c0_i32_0 : i32, i32
  }
  func.func @transform_7(%arg0: i32) -> (i32, i32) {
    %c0_i32 = arith.constant 0 : i32
    %c0_i32_0 = arith.constant 0 : i32
    %c0_i32_1 = arith.constant 0 : i32
    return %c0_i32, %c0_i32_0 : i32, i32
  }
  func.func @transform_8(%arg0: i32) -> (i32, i32) {
    %c0_i32 = arith.constant 0 : i32
    %c0_i32_0 = arith.constant 0 : i32
    %c0_i32_1 = arith.constant 0 : i32
    return %c0_i32, %c0_i32_0 : i32, i32
  }
}

</mosaic_0001>

<llo_original>
// kernel: tpu_custom_call.1
$region0: #{tpu_custom_call.1}
  #allocation0 [shape = 'u32[]', space=smem, size = 0x4, offset = 0x4, fixed_abs, tag = 'smem constant byte address 0x4 - core index']
  #allocation1 [shape = 'u32[144,128]{1,0:T(1,128)}', space=vmem, size = 0x12000, scoped, tag = 'internal scratch']
  %s0 = inlined_call_operand.vmem [shape: f32[20,40], index: 0, kind: input, shape index: {}]
  %s1 = inlined_call_operand.vmem [shape: f32[4,40], index: 1, kind: input, shape index: {}]
  %s2 = inlined_call_operand.vmem [shape: f32[32,2], index: 2, kind: input, shape index: {}]
  %s3 = inlined_call_operand.vmem [shape: f32[32,20], index: 3, kind: input, shape index: {}]
  %s4 = inlined_call_operand.vmem [shape: f32[32,160], index: 4, kind: input, shape index: {}]
  %s5 = inlined_call_operand.vmem [shape: f32[32,32], index: 5, kind: input, shape index: {}]
  %s6 = inlined_call_operand.vmem [shape: f32[32,4], index: 6, kind: input, shape index: {}]
  %s7 = inlined_call_operand.vmem [shape: f32[32,8], index: 7, kind: input, shape index: {}]
  %s8 = inlined_call_operand.hbm [shape: f32[32,40], index: 8, kind: output, shape index: {}]
  %s9 = sld [smem:[#allocation0]]
  $region42: #{tpu_custom_call.1} parent=0
    _
  %s11 = ssub.s32 1, %s9
  %s12 = scalar_select 0, %s11, %s9
  $region1: #{tpu_custom_call.1} parent=0
    #allocation2 [shape = 'u8[16384]{0}', space=vmem, size = 0x4000, scoped, tag = 'output window, operand 0, single buffered']
    #allocation3 [shape = 's32[1]{0}', space=sflag, size = 0x4, scoped, tag = 'scoped memory for tpu_custom_call.1']
    %13 = vsyncpa [#allocation3], 0
    // Predicated region
    $region2: #{tpu_custom_call.1} parent=1 // pred_check
      _
    $region3: #{tpu_custom_call.1} parent=1 // pred_check_branch
      %15 = sbr.rel (0) target = $region5
    $region4: #{tpu_custom_call.1} parent=1 // pred_region
      _
    $region5: #{tpu_custom_call.1} parent=1 // pred_fallthru
      _
    // Predicated region
    $region6: #{tpu_custom_call.1} parent=1 // pred_check
      _
    $region7: #{tpu_custom_call.1} parent=1 // pred_check_branch
      %17 = sbr.rel (0) target = $region9
    $region8: #{tpu_custom_call.1} parent=1 // pred_region
      _
    $region9: #{tpu_custom_call.1} parent=1 // pred_fallthru
      _
    // Predicated region
    $region10: #{tpu_custom_call.1} parent=1 // pred_check
      _
    $region11: #{tpu_custom_call.1} parent=1 // pred_check_branch
      %19 = sbr.rel (0) target = $region13
    $region12: #{tpu_custom_call.1} parent=1 // pred_region
      _
    $region13: #{tpu_custom_call.1} parent=1 // pred_fallthru
      _
    // Predicated region
    $region14: #{tpu_custom_call.1} parent=1 // pred_check
      _
    $region15: #{tpu_custom_call.1} parent=1 // pred_check_branch
      %21 = sbr.rel (0) target = $region17
    $region16: #{tpu_custom_call.1} parent=1 // pred_region
      _
    $region17: #{tpu_custom_call.1} parent=1 // pred_fallthru
      _
    // Predicated region
    $region18: #{tpu_custom_call.1} parent=1 // pred_check
      _
    $region19: #{tpu_custom_call.1} parent=1 // pred_check_branch
      %23 = sbr.rel (0) target = $region21
    $region20: #{tpu_custom_call.1} parent=1 // pred_region
      _
    $region21: #{tpu_custom_call.1} parent=1 // pred_fallthru
      _
    // Predicated region
    $region22: #{tpu_custom_call.1} parent=1 // pred_check
      _
    $region23: #{tpu_custom_call.1} parent=1 // pred_check_branch
      %25 = sbr.rel (0) target = $region25
    $region24: #{tpu_custom_call.1} parent=1 // pred_region
      _
    $region25: #{tpu_custom_call.1} parent=1 // pred_fallthru
      _
    // Predicated region
    $region26: #{tpu_custom_call.1} parent=1 // pred_check
      _
    $region27: #{tpu_custom_call.1} parent=1 // pred_check_branch
      %27 = sbr.rel (0) target = $region29
    $region28: #{tpu_custom_call.1} parent=1 // pred_region
      _
    $region29: #{tpu_custom_call.1} parent=1 // pred_fallthru
      _
    // Predicated region
    $region30: #{tpu_custom_call.1} parent=1 // pred_check
      _
    $region31: #{tpu_custom_call.1} parent=1 // pred_check_branch
      %29 = sbr.rel (0) target = $region33
    $region32: #{tpu_custom_call.1} parent=1 // pred_region
      _
    $region33: #{tpu_custom_call.1} parent=1 // pred_fallthru
      _
    %v30 = vlaneseq
    %v31 = vand.u32 %v30, 127
    %v32 = vcvt.s32.f32 %v31
    %v33 = vrcp.pop 20.0
    %v34 = vmul.f32 %v32, %v33
    %v35 = vfloor.f32 %v34
    %v36 = vmul.f32 %v35, 20.0
    %v37 = vsub.f32 %v32, %v36
    %vm38 = vcmp.ge.f32.partialorder %v37, 2.0
    %vm39 = vcmp.lt.f32.partialorder %v37, 18.0
    %vm40 = vmand %vm38, %vm39
    %v41 = vsel %vm40, 1.0, 0.0
    %v42 = vlaneseq
    %v43 = vshrl.u32 %v42, 7
    %v44 = vadd.s32 %v43, 8
    %v45 = vadd.s32 %v43, 16
    %v46 = vadd.s32 %v43, 24
    %v47 = vcvt.s32.f32 %v43
    %v48 = vcvt.s32.f32 %v44
    %v49 = vcvt.s32.f32 %v45
    %v50 = vcvt.s32.f32 %v46
    %v51 = vrcp.pop 4.0
    %v52 = vmul.f32 %v47, %v51
    %v53 = vmul.f32 %v48, %v51
    %v54 = vmul.f32 %v49, %v51
    %v55 = vmul.f32 %v50, %v51
    %v56 = vfloor.f32 %v52
    %v57 = vfloor.f32 %v53
    %v58 = vfloor.f32 %v54
    %v59 = vfloor.f32 %v55
    %v60 = vmul.f32 %v32, %v51
    %v61 = vfloor.f32 %v60
    %vm62 = vcmp.eq.f32.partialorder %v56, %v61
    %vm63 = vcmp.eq.f32.partialorder %v57, %v61
    %vm64 = vcmp.eq.f32.partialorder %v58, %v61
    %vm65 = vcmp.eq.f32.partialorder %v59, %v61
    %v66 = vsel %vm62, 1.0, 0.0
    %v67 = vsel %vm63, 1.0, 0.0
    %v68 = vsel %vm64, 1.0, 0.0
    %v69 = vsel %vm65, 1.0, 0.0
    %vm70 = vcmp.eq.f32.partialorder %v35, 0.0
    %v71 = vsel %vm70, 1.0, 0.0
    %vm72 = vcmp.eq.f32.partialorder %v35, 1.0
    %v73 = vsel %vm72, 1.0, 0.0
    %v74 = vld [vmem:[%s7] sm:$0xff]
    %v75 = vld [vmem:[%s7 + $0x8] sm:$0xff]
    %v76 = vld [vmem:[%s7 + $0x10] sm:$0xff]
    %v77 = vld [vmem:[%s7 + $0x18] sm:$0xff]
    %v78 = vld [vmem:[%s3] sm:$0xff]
    %v79 = vld [vmem:[%s3 + $0x8] sm:$0xff]
    %v80 = vld [vmem:[%s3 + $0x10] sm:$0xff]
    %v81 = vld [vmem:[%s3 + $0x18] sm:$0xff]
    %v82 = vld [vmem:[%s0] sm:$0xff]
    %v83 = vld [vmem:[%s0 + $0x8] sm:$0xff]
    %v84 = vld [vmem:[%s0 + $0x10] sm:$0xf]
    %86 = vset.pattern.permute.xlu0 0
    %87 = vperm.xlu0 %86, %v74
    %v88 = vpop.permute.xlu0 %87
    %91 = vset.pattern.permute.xlu0 0
    %92 = vperm.xlu0 %91, %v75
    %v93 = vpop.permute.xlu0 %92
    %96 = vset.pattern.permute.xlu0 0
    %97 = vperm.xlu0 %96, %v76
    %v98 = vpop.permute.xlu0 %97
    %101 = vset.pattern.permute.xlu0 0
    %102 = vperm.xlu0 %101, %v77
    %v103 = vpop.permute.xlu0 %102
    %vm105 = vcmask 162816
    %v107 = vsel %vm105, %v78, 0
    %v110 = vsel %vm105, %v79, 0
    %v113 = vsel %vm105, %v80, 0
    %v116 = vsel %vm105, %v81, 0
    %vm118 = vcmask 1043456
    %v120 = vsel %vm118, %v84, 0
    %122 = vmatprep.subr.mxu0 0.0
    %123 = vmatpush1.msra.mxu0 %v82
    %124 = vmatprep.subr.mxu0 0.0
    %125 = vmatpush1.msra.mxu0 %v83
    %126 = vmatprep.subr.mxu0 0.0
    %127 = vmatpush1.msra.mxu0 %v120
    %128 = vmatprep.subr.mxu0 0.0
    %129 = vmatpush1.msra.mxu0 0.0
    %130 = vmatprep.subr.mxu0 0.0
    %131 = vmatpush1.msra.mxu0 0.0
    %132 = vmatprep.subr.mxu0 0.0
    %133 = vmatpush1.msra.mxu0 0.0
    %134 = vmatprep.subr.mxu0 0.0
    %135 = vmatpush1.msra.mxu0 0.0
    %136 = vmatprep.subr.mxu0 0.0
    %137 = vmatpush1.msra.mxu0 0.0
    %138 = vmatprep.subr.mxu0 0.0
    %139 = vmatpush1.msra.mxu0 0.0
    %140 = vmatprep.subr.mxu0 0.0
    %141 = vmatpush1.msra.mxu0 0.0
    %142 = vmatprep.subr.mxu0 0.0
    %143 = vmatpush1.msra.mxu0 0.0
    %144 = vmatprep.subr.mxu0 0.0
    %145 = vmatpush1.msra.mxu0 0.0
    %146 = vmatprep.subr.mxu0 0.0
    %147 = vmatpush1.msra.mxu0 0.0
    %148 = vmatprep.subr.mxu0 0.0
    %149 = vmatpush1.msra.mxu0 0.0
    %150 = vmatprep.subr.mxu0 0.0
    %151 = vmatpush1.msra.mxu0 0.0
    %152 = vmatprep.subr.mxu0 0.0
    %153 = vmatpush1.msra.mxu0 0.0
    %154 = vmatprep.subr.mxu0 0.0
    %155 = vmatpush1.msra.mxu0 0.0
    %156 = vmatprep.subr.mxu0 0.0
    %157 = vmatpush1.msra.mxu0 0.0
    %158 = vmatprep.subr.mxu0 0.0
    %159 = vmatpush1.msra.mxu0 0.0
    %160 = vmatprep.subr.mxu0 0.0
    %161 = vmatpush1.msra.mxu0 0.0
    %162 = vmatprep.subr.mxu0 0.0
    %163 = vmatpush1.msra.mxu0 0.0
    %164 = vmatprep.subr.mxu0 0.0
    %165 = vmatpush1.msra.mxu0 0.0
    %166 = vmatprep.subr.mxu0 0.0
    %167 = vmatpush1.msra.mxu0 0.0
    %168 = vmatprep.subr.mxu0 0.0
    %169 = vmatpush1.msra.mxu0 0.0
    %170 = vmatprep.subr.mxu0 0.0
    %171 = vmatpush1.msra.mxu0 0.0
    %172 = vmatprep.subr.mxu0 0.0
    %173 = vmatpush1.msra.mxu0 0.0
    %174 = vmatprep.subr.mxu0 0.0
    %175 = vmatpush1.msra.mxu0 0.0
    %176 = vmatprep.subr.mxu0 0.0
    %177 = vmatpush1.msra.mxu0 0.0
    %178 = vmatprep.subr.mxu0 0.0
    %179 = vmatpush1.msra.mxu0 0.0
    %180 = vmatprep.subr.mxu0 0.0
    %181 = vmatpush1.msra.mxu0 0.0
    %182 = vmatprep.subr.mxu0 0.0
    %183 = vmatpush1.msra.mxu0 0.0
    %184 = vmatprep.subr.mxu0 0.0
    %185 = vmatpush1.msra.mxu0 0.0
    %186 = vmatprep.mubr.f32.mxu0 0.0
    %187 = vmatmul.mubr.f32.gmra.mrb[0].mxu0 %v107
    %v188 = vpop.f32.mrb[0].mxu0
    %v189 = vadd.f32 %v88, %v188
    %v190 = vpop.f32.mrb[0].mxu0
    %191 = vmatprep.mubr.f32.mxu0 0.0
    %192 = vmatmul.mubr.f32.gmra.mrb[0].mxu0 %v110
    %v193 = vpop.f32.mrb[0].mxu0
    %v194 = vadd.f32 %v93, %v193
    %v195 = vpop.f32.mrb[0].mxu0
    %196 = vmatprep.mubr.f32.mxu0 0.0
    %197 = vmatmul.mubr.f32.gmra.mrb[0].mxu0 %v113
    %v198 = vpop.f32.mrb[0].mxu0
    %v199 = vadd.f32 %v98, %v198
    %v200 = vpop.f32.mrb[0].mxu0
    %201 = vmatprep.mubr.f32.mxu0 0.0
    %202 = vmatmul.mubr.f32.gmra.mrb[0].mxu0 %v116
    %v203 = vpop.f32.mrb[0].mxu0
    %v204 = vadd.f32 %v103, %v203
    %v205 = vpop.f32.mrb[0].mxu0
    %206 = vdwg.mxu0
    %v207 = vmul.f32 %v189, %v41
    %v208 = vmul.f32 %v194, %v41
    %v209 = vmul.f32 %v199, %v41
    %v210 = vmul.f32 %v204, %v41
    %v211 = vmul.f32 %v207, %v71
    %v212 = vmul.f32 %v208, %v71
    %v213 = vmul.f32 %v209, %v71
    %v214 = vmul.f32 %v210, %v71
    %vm215 = vcmask 326656
    %v216 = vsel %vm215, %v211, 0.0
    %217 = vadd.xlane.f32.xlu0 %v216
    %v218 = vpop.xlane.xlu0 %217
    %v219 = vsel %vm215, %v212, 0.0
    %220 = vadd.xlane.f32.xlu0 %v219
    %v221 = vpop.xlane.xlu0 %220
    %v222 = vsel %vm215, %v213, 0.0
    %223 = vadd.xlane.f32.xlu0 %v222
    %v224 = vpop.xlane.xlu0 %223
    %v225 = vsel %vm215, %v214, 0.0
    %226 = vadd.xlane.f32.xlu0 %v225
    %v227 = vpop.xlane.xlu0 %226
    %v228 = vmul.f32 %v218, %v71
    %v229 = vmul.f32 %v221, %v71
    %v230 = vmul.f32 %v224, %v71
    %v231 = vmul.f32 %v227, %v71
    %v232 = vadd.f32 %v228, 0.0
    %v233 = vadd.f32 %v229, 0.0
    %v234 = vadd.f32 %v230, 0.0
    %v235 = vadd.f32 %v231, 0.0
    %v236 = vmul.f32 %v207, %v73
    %v237 = vmul.f32 %v208, %v73
    %v238 = vmul.f32 %v209, %v73
    %v239 = vmul.f32 %v210, %v73
    %v240 = vsel %vm215, %v236, 0.0
    %241 = vadd.xlane.f32.xlu0 %v240
    %v242 = vpop.xlane.xlu0 %241
    %v243 = vsel %vm215, %v237, 0.0
    %244 = vadd.xlane.f32.xlu0 %v243
    %v245 = vpop.xlane.xlu0 %244
    %v246 = vsel %vm215, %v238, 0.0
    %247 = vadd.xlane.f32.xlu0 %v246
    %v248 = vpop.xlane.xlu0 %247
    %v249 = vsel %vm215, %v239, 0.0
    %250 = vadd.xlane.f32.xlu0 %v249
    %v251 = vpop.xlane.xlu0 %250
    %v252 = vmul.f32 %v242, %v73
    %v253 = vmul.f32 %v245, %v73
    %v254 = vmul.f32 %v248, %v73
    %v255 = vmul.f32 %v251, %v73
    %v256 = vadd.f32 %v232, %v252
    %v257 = vadd.f32 %v233, %v253
    %v258 = vadd.f32 %v234, %v254
    %v259 = vadd.f32 %v235, %v255
    %vm260 = vcmask 261120
    %v262 = vsel %vm260, %v66, 0
    %v265 = vsel %vm260, %v67, 0
    %v268 = vsel %vm260, %v68, 0
    %v271 = vsel %vm260, %v69, 0
    %273 = vmatprep.subr.mxu0 0.0
    %274 = vmatpush1.msra.mxu0 %v256
    %275 = vmatprep.subr.mxu0 0.0
    %276 = vmatpush1.msra.mxu0 %v257
    %277 = vmatprep.subr.mxu0 0.0
    %278 = vmatpush1.msra.mxu0 %v258
    %279 = vmatprep.subr.mxu0 0.0
    %280 = vmatpush1.msra.mxu0 %v259
    %281 = vmatprep.subr.mxu0 0.0
    %282 = vmatpush1.msra.mxu0 0.0
    %283 = vmatprep.subr.mxu0 0.0
    %284 = vmatpush1.msra.mxu0 0.0
    %285 = vmatprep.subr.mxu0 0.0
    %286 = vmatpush1.msra.mxu0 0.0
    %287 = vmatprep.subr.mxu0 0.0
    %288 = vmatpush1.msra.mxu0 0.0
    %289 = vmatprep.subr.mxu0 0.0
    %290 = vmatpush1.msra.mxu0 0.0
    %291 = vmatprep.subr.mxu0 0.0
    %292 = vmatpush1.msra.mxu0 0.0
    %293 = vmatprep.subr.mxu0 0.0
    %294 = vmatpush1.msra.mxu0 0.0
    %295 = vmatprep.subr.mxu0 0.0
    %296 = vmatpush1.msra.mxu0 0.0
    %297 = vmatprep.subr.mxu0 0.0
    %298 = vmatpush1.msra.mxu0 0.0
    %299 = vmatprep.subr.mxu0 0.0
    %300 = vmatpush1.msra.mxu0 0.0
    %301 = vmatprep.subr.mxu0 0.0
    %302 = vmatpush1.msra.mxu0 0.0
    %303 = vmatprep.subr.mxu0 0.0
    %304 = vmatpush1.msra.mxu0 0.0
    %305 = vmatprep.subr.mxu0 0.0
    %306 = vmatpush1.msra.mxu0 0.0
    %307 = vmatprep.subr.mxu0 0.0
    %308 = vmatpush1.msra.mxu0 0.0
    %309 = vmatprep.subr.mxu0 0.0
    %310 = vmatpush1.msra.mxu0 0.0
    %311 = vmatprep.subr.mxu0 0.0
    %312 = vmatpush1.msra.mxu0 0.0
    %313 = vmatprep.subr.mxu0 0.0
    %314 = vmatpush1.msra.mxu0 0.0
    %315 = vmatprep.subr.mxu0 0.0
    %316 = vmatpush1.msra.mxu0 0.0
    %317 = vmatprep.subr.mxu0 0.0
    %318 = vmatpush1.msra.mxu0 0.0
    %319 = vmatprep.subr.mxu0 0.0
    %320 = vmatpush1.msra.mxu0 0.0
    %321 = vmatprep.subr.mxu0 0.0
    %322 = vmatpush1.msra.mxu0 0.0
    %323 = vmatprep.subr.mxu0 0.0
    %324 = vmatpush1.msra.mxu0 0.0
    %325 = vmatprep.subr.mxu0 0.0
    %326 = vmatpush1.msra.mxu0 0.0
    %327 = vmatprep.subr.mxu0 0.0
    %328 = vmatpush1.msra.mxu0 0.0
    %329 = vmatprep.subr.mxu0 0.0
    %330 = vmatpush1.msra.mxu0 0.0
    %331 = vmatprep.subr.mxu0 0.0
    %332 = vmatpush1.msra.mxu0 0.0
    %333 = vmatprep.subr.mxu0 0.0
    %334 = vmatpush1.msra.mxu0 0.0
    %335 = vmatprep.subr.mxu0 0.0
    %336 = vmatpush1.msra.mxu0 0.0
    %337 = vmatprep.mubr.f32.mxu0 0.0
    %338 = vmatmul.mubr.f32.gmra.mrb[0].mxu0 %v262
    %v339 = vpop.f32.mrb[0].mxu0
    %v340 = vadd.f32 0.0, %v339
    %v341 = vpop.f32.mrb[0].mxu0
    %342 = vmatprep.mubr.f32.mxu0 0.0
    %343 = vmatmul.mubr.f32.gmra.mrb[0].mxu0 %v265
    %v344 = vpop.f32.mrb[0].mxu0
    %v345 = vadd.f32 0.0, %v344
    %v346 = vpop.f32.mrb[0].mxu0
    %347 = vmatprep.mubr.f32.mxu0 0.0
    %348 = vmatmul.mubr.f32.gmra.mrb[0].mxu0 %v268
    %v349 = vpop.f32.mrb[0].mxu0
    %v350 = vadd.f32 0.0, %v349
    %v351 = vpop.f32.mrb[0].mxu0
    %352 = vmatprep.mubr.f32.mxu0 0.0
    %353 = vmatmul.mubr.f32.gmra.mrb[0].mxu0 %v271
    %v354 = vpop.f32.mrb[0].mxu0
    %v355 = vadd.f32 0.0, %v354
    %v356 = vpop.f32.mrb[0].mxu0
    %357 = vdwg.mxu0
    %v358 = vmul.f32 %v340, 0.015625
    %v359 = vmul.f32 %v345, 0.015625
    %v360 = vmul.f32 %v350, 0.015625
    %v361 = vmul.f32 %v355, 0.015625
    %v362 = vsub.f32 %v189, %v358
    %v363 = vsub.f32 %v194, %v359
    %v364 = vsub.f32 %v199, %v360
    %v365 = vsub.f32 %v204, %v361
    %v366 = vmul.f32 %v362, %v41
    %v367 = vmul.f32 %v363, %v41
    %v368 = vmul.f32 %v364, %v41
    %v369 = vmul.f32 %v365, %v41
    %v370 = vmul.f32 %v366, %v366
    %v371 = vmul.f32 %v367, %v367
    %v372 = vmul.f32 %v368, %v368
    %v373 = vmul.f32 %v369, %v369
    %v374 = vmul.f32 %v370, %v71
    %v375 = vmul.f32 %v371, %v71
    %v376 = vmul.f32 %v372, %v71
    %v377 = vmul.f32 %v373, %v71
    %v378 = vsel %vm215, %v374, 0.0
    %379 = vadd.xlane.f32.xlu0 %v378
    %v380 = vpop.xlane.xlu0 %379
    %v381 = vsel %vm215, %v375, 0.0
    %382 = vadd.xlane.f32.xlu0 %v381
    %v383 = vpop.xlane.xlu0 %382
    %v384 = vsel %vm215, %v376, 0.0
    %385 = vadd.xlane.f32.xlu0 %v384
    %v386 = vpop.xlane.xlu0 %385
    %v387 = vsel %vm215, %v377, 0.0
    %388 = vadd.xlane.f32.xlu0 %v387
    %v389 = vpop.xlane.xlu0 %388
    %v390 = vmul.f32 %v380, %v71
    %v391 = vmul.f32 %v383, %v71
    %v392 = vmul.f32 %v386, %v71
    %v393 = vmul.f32 %v389, %v71
    %v394 = vadd.f32 %v390, 0.0
    %v395 = vadd.f32 %v391, 0.0
    %v396 = vadd.f32 %v392, 0.0
    %v397 = vadd.f32 %v393, 0.0
    %v398 = vmul.f32 %v370, %v73
    %v399 = vmul.f32 %v371, %v73
    %v400 = vmul.f32 %v372, %v73
    %v401 = vmul.f32 %v373, %v73
    %v402 = vsel %vm215, %v398, 0.0
    %403 = vadd.xlane.f32.xlu0 %v402
    %v404 = vpop.xlane.xlu0 %403
    %v405 = vsel %vm215, %v399, 0.0
    %406 = vadd.xlane.f32.xlu0 %v405
    %v407 = vpop.xlane.xlu0 %406
    %v408 = vsel %vm215, %v400, 0.0
    %409 = vadd.xlane.f32.xlu0 %v408
    %v410 = vpop.xlane.xlu0 %409
    %v411 = vsel %vm215, %v401, 0.0
    %412 = vadd.xlane.f32.xlu0 %v411
    %v413 = vpop.xlane.xlu0 %412
    %v414 = vmul.f32 %v404, %v73
    %v415 = vmul.f32 %v407, %v73
    %v416 = vmul.f32 %v410, %v73
    %v417 = vmul.f32 %v413, %v73
    %v418 = vadd.f32 %v394, %v414
    %v419 = vadd.f32 %v395, %v415
    %v420 = vadd.f32 %v396, %v416
    %v421 = vadd.f32 %v397, %v417
    %422 = vmatprep.subr.mxu0 0.0
    %423 = vmatpush1.msra.mxu0 %v418
    %424 = vmatprep.subr.mxu0 0.0
    %425 = vmatpush1.msra.mxu0 %v419
    %426 = vmatprep.subr.mxu0 0.0
    %427 = vmatpush1.msra.mxu0 %v420
    %428 = vmatprep.subr.mxu0 0.0
    %429 = vmatpush1.msra.mxu0 %v421
    %430 = vmatprep.subr.mxu0 0.0
    %431 = vmatpush1.msra.mxu0 0.0
    %432 = vmatprep.subr.mxu0 0.0
    %433 = vmatpush1.msra.mxu0 0.0
    %434 = vmatprep.subr.mxu0 0.0
    %435 = vmatpush1.msra.mxu0 0.0
    %436 = vmatprep.subr.mxu0 0.0
    %437 = vmatpush1.msra.mxu0 0.0
    %438 = vmatprep.subr.mxu0 0.0
    %439 = vmatpush1.msra.mxu0 0.0
    %440 = vmatprep.subr.mxu0 0.0
    %441 = vmatpush1.msra.mxu0 0.0
    %442 = vmatprep.subr.mxu0 0.0
    %443 = vmatpush1.msra.mxu0 0.0
    %444 = vmatprep.subr.mxu0 0.0
    %445 = vmatpush1.msra.mxu0 0.0
    %446 = vmatprep.subr.mxu0 0.0
    %447 = vmatpush1.msra.mxu0 0.0
    %448 = vmatprep.subr.mxu0 0.0
    %449 = vmatpush1.msra.mxu0 0.0
    %450 = vmatprep.subr.mxu0 0.0
    %451 = vmatpush1.msra.mxu0 0.0
    %452 = vmatprep.subr.mxu0 0.0
    %453 = vmatpush1.msra.mxu0 0.0
    %454 = vmatprep.subr.mxu0 0.0
    %455 = vmatpush1.msra.mxu0 0.0
    %456 = vmatprep.subr.mxu0 0.0
    %457 = vmatpush1.msra.mxu0 0.0
    %458 = vmatprep.subr.mxu0 0.0
    %459 = vmatpush1.msra.mxu0 0.0
    %460 = vmatprep.subr.mxu0 0.0
    %461 = vmatpush1.msra.mxu0 0.0
    %462 = vmatprep.subr.mxu0 0.0
    %463 = vmatpush1.msra.mxu0 0.0
    %464 = vmatprep.subr.mxu0 0.0
    %465 = vmatpush1.msra.mxu0 0.0
    %466 = vmatprep.subr.mxu0 0.0
    %467 = vmatpush1.msra.mxu0 0.0
    %468 = vmatprep.subr.mxu0 0.0
    %469 = vmatpush1.msra.mxu0 0.0
    %470 = vmatprep.subr.mxu0 0.0
    %471 = vmatpush1.msra.mxu0 0.0
    %472 = vmatprep.subr.mxu0 0.0
    %473 = vmatpush1.msra.mxu0 0.0
    %474 = vmatprep.subr.mxu0 0.0
    %475 = vmatpush1.msra.mxu0 0.0
    %476 = vmatprep.subr.mxu0 0.0
    %477 = vmatpush1.msra.mxu0 0.0
    %478 = vmatprep.subr.mxu0 0.0
    %479 = vmatpush1.msra.mxu0 0.0
    %480 = vmatprep.subr.mxu0 0.0
    %481 = vmatpush1.msra.mxu0 0.0
    %482 = vmatprep.subr.mxu0 0.0
    %483 = vmatpush1.msra.mxu0 0.0
    %484 = vmatprep.subr.mxu0 0.0
    %485 = vmatpush1.msra.mxu0 0.0
    %486 = vmatprep.mubr.f32.mxu0 0.0
    %487 = vmatmul.mubr.f32.gmra.mrb[0].mxu0 %v262
    %v488 = vpop.f32.mrb[0].mxu0
    %v489 = vadd.f32 0.0, %v488
    %v490 = vpop.f32.mrb[0].mxu0
    %491 = vmatprep.mubr.f32.mxu0 0.0
    %492 = vmatmul.mubr.f32.gmra.mrb[0].mxu0 %v265
    %v493 = vpop.f32.mrb[0].mxu0
    %v494 = vadd.f32 0.0, %v493
    %v495 = vpop.f32.mrb[0].mxu0
    %496 = vmatprep.mubr.f32.mxu0 0.0
    %497 = vmatmul.mubr.f32.gmra.mrb[0].mxu0 %v268
    %v498 = vpop.f32.mrb[0].mxu0
    %v499 = vadd.f32 0.0, %v498
    %v500 = vpop.f32.mrb[0].mxu0
    %501 = vmatprep.mubr.f32.mxu0 0.0
    %502 = vmatmul.mubr.f32.gmra.mrb[0].mxu0 %v271
    %v503 = vpop.f32.mrb[0].mxu0
    %v504 = vadd.f32 0.0, %v503
    %v505 = vpop.f32.mrb[0].mxu0
    %506 = vdwg.mxu0
    %v507 = vmul.f32 %v489, 0.015625
    %v508 = vmul.f32 %v494, 0.015625
    %v509 = vmul.f32 %v499, 0.015625
    %v510 = vmul.f32 %v504, 0.015625
    %v511 = vadd.f32 %v507, 1e-05
    %v512 = vadd.f32 %v508, 1e-05
    %v513 = vadd.f32 %v509, 1e-05
    %v514 = vadd.f32 %v510, 1e-05
    %v515 = vrsqrt.pop %v511
    %v516 = vrsqrt.pop %v512
    %v517 = vrsqrt.pop %v513
    %v518 = vrsqrt.pop %v514
    %v519 = vmul.f32 %v362, %v515
    %v520 = vmul.f32 %v363, %v516
    %v521 = vmul.f32 %v364, %v517
    %v522 = vmul.f32 %v365, %v518
    %523 = vset.pattern.permute.xlu0 1
    %524 = vperm.xlu0 %523, %v74
    %v525 = vpop.permute.xlu0 %524
    %527 = vset.pattern.permute.xlu0 1
    %528 = vperm.xlu0 %527, %v75
    %v529 = vpop.permute.xlu0 %528
    %531 = vset.pattern.permute.xlu0 1
    %532 = vperm.xlu0 %531, %v76
    %v533 = vpop.permute.xlu0 %532
    %535 = vset.pattern.permute.xlu0 1
    %536 = vperm.xlu0 %535, %v77
    %v537 = vpop.permute.xlu0 %536
    %v539 = vmul.f32 %v519, %v525
    %v540 = vmul.f32 %v520, %v529
    %v541 = vmul.f32 %v521, %v533
    %v542 = vmul.f32 %v522, %v537
    %543 = vset.pattern.permute.xlu0 2
    %544 = vperm.xlu0 %543, %v74
    %v545 = vpop.permute.xlu0 %544
    %547 = vset.pattern.permute.xlu0 2
    %548 = vperm.xlu0 %547, %v75
    %v549 = vpop.permute.xlu0 %548
    %551 = vset.pattern.permute.xlu0 2
    %552 = vperm.xlu0 %551, %v76
    %v553 = vpop.permute.xlu0 %552
    %555 = vset.pattern.permute.xlu0 2
    %556 = vperm.xlu0 %555, %v77
    %v557 = vpop.permute.xlu0 %556
    %v559 = vadd.f32 %v539, %v545
    %v560 = vadd.f32 %v540, %v549
    %v561 = vadd.f32 %v541, %v553
    %v562 = vadd.f32 %v542, %v557
    %v563 = vmin.f32 %v559, 20.0
    %v564 = vmin.f32 %v560, 20.0
    %v565 = vmin.f32 %v561, 20.0
    %v566 = vmin.f32 %v562, 20.0
    %v567 = vmul.f32 %v563, 1.442695
    %v568 = vpow.pop %v567
    %v569 = vmul.f32 %v564, 1.442695
    %v570 = vpow.pop %v569
    %v571 = vmul.f32 %v565, 1.442695
    %v572 = vpow.pop %v571
    %v573 = vmul.f32 %v566, 1.442695
    %v574 = vpow.pop %v573
    %v575 = vadd.f32 %v568, 1.0
    %v576 = vadd.f32 %v570, 1.0
    %v577 = vadd.f32 %v572, 1.0
    %v578 = vadd.f32 %v574, 1.0
    %v579 = vmul.f32 %v575, %v575
    %v580 = vmul.f32 %v576, %v576
    %v581 = vmul.f32 %v577, %v577
    %v582 = vmul.f32 %v578, %v578
    %v583 = vsub.f32 %v579, 1.0
    %v584 = vsub.f32 %v580, 1.0
    %v585 = vsub.f32 %v581, 1.0
    %v586 = vsub.f32 %v582, 1.0
    %v587 = vmul.f32 %v559, %v583
    %v588 = vmul.f32 %v560, %v584
    %v589 = vmul.f32 %v561, %v585
    %v590 = vmul.f32 %v562, %v586
    %v591 = vadd.f32 %v579, 1.0
    %v592 = vadd.f32 %v580, 1.0
    %v593 = vadd.f32 %v581, 1.0
    %v594 = vadd.f32 %v582, 1.0
    %v595 = vrcp.pop %v591
    %v596 = vmul.f32 %v587, %v595
    %v597 = vrcp.pop %v592
    %v598 = vmul.f32 %v588, %v597
    %v599 = vrcp.pop %v593
    %v600 = vmul.f32 %v589, %v599
    %v601 = vrcp.pop %v594
    %v602 = vmul.f32 %v590, %v601
    %v603 = vld [vmem:[%s5] sm:$0xff]
    %v604 = vld [vmem:[%s5 + $0x8] sm:$0xff]
    %v605 = vld [vmem:[%s5 + $0x10] sm:$0xff]
    %v606 = vld [vmem:[%s5 + $0x18] sm:$0xff]
    %v607 = vld [vmem:[%s2] sm:$0xff]
    %v608 = vld [vmem:[%s2 + $0x8] sm:$0xff]
    %v609 = vld [vmem:[%s2 + $0x10] sm:$0xff]
    %v610 = vld [vmem:[%s2 + $0x18] sm:$0xff]
    %v611 = vmin.f32 %v607, 20.0
    %v612 = vmin.f32 %v608, 20.0
    %v613 = vmin.f32 %v609, 20.0
    %v614 = vmin.f32 %v610, 20.0
    %v615 = vmul.f32 %v611, 1.442695
    %v616 = vpow.pop %v615
    %v617 = vmul.f32 %v612, 1.442695
    %v618 = vpow.pop %v617
    %v619 = vmul.f32 %v613, 1.442695
    %v620 = vpow.pop %v619
    %v621 = vmul.f32 %v614, 1.442695
    %v622 = vpow.pop %v621
    %v623 = vadd.f32 %v616, 1.0
    %v624 = vadd.f32 %v618, 1.0
    %v625 = vadd.f32 %v620, 1.0
    %v626 = vadd.f32 %v622, 1.0
    %v627 = vmul.f32 %v623, %v623
    %v628 = vmul.f32 %v624, %v624
    %v629 = vmul.f32 %v625, %v625
    %v630 = vmul.f32 %v626, %v626
    %v631 = vsub.f32 %v627, 1.0
    %v632 = vsub.f32 %v628, 1.0
    %v633 = vsub.f32 %v629, 1.0
    %v634 = vsub.f32 %v630, 1.0
    %v635 = vmul.f32 %v607, %v631
    %v636 = vmul.f32 %v608, %v632
    %v637 = vmul.f32 %v609, %v633
    %v638 = vmul.f32 %v610, %v634
    %v639 = vadd.f32 %v627, 1.0
    %v640 = vadd.f32 %v628, 1.0
    %v641 = vadd.f32 %v629, 1.0
    %v642 = vadd.f32 %v630, 1.0
    %v643 = vrcp.pop %v639
    %v644 = vmul.f32 %v635, %v643
    %v645 = vrcp.pop %v640
    %v646 = vmul.f32 %v636, %v645
    %v647 = vrcp.pop %v641
    %v648 = vmul.f32 %v637, %v647
    %v649 = vrcp.pop %v642
    %v650 = vmul.f32 %v638, %v649
    %651 = vset.pattern.permute.xlu0 6
    %652 = vperm.xlu0 %651, %v74
    %v653 = vpop.permute.xlu0 %652
    %655 = vset.pattern.permute.xlu0 6
    %656 = vperm.xlu0 %655, %v75
    %v657 = vpop.permute.xlu0 %656
    %659 = vset.pattern.permute.xlu0 6
    %660 = vperm.xlu0 %659, %v76
    %v661 = vpop.permute.xlu0 %660
    %663 = vset.pattern.permute.xlu0 6
    %664 = vperm.xlu0 %663, %v77
    %v665 = vpop.permute.xlu0 %664
    %v668 = vsel %vm260, %v603, 0
    %v671 = vsel %vm260, %v604, 0
    %v674 = vsel %vm260, %v605, 0
    %v677 = vsel %vm260, %v606, 0
    %679 = vmatprep.subr.mxu0 0.0
    %680 = vmatpush1.msra.mxu0 %v644
    %681 = vmatprep.subr.mxu0 0.0
    %682 = vmatpush1.msra.mxu0 %v646
    %683 = vmatprep.subr.mxu0 0.0
    %684 = vmatpush1.msra.mxu0 %v648
    %685 = vmatprep.subr.mxu0 0.0
    %686 = vmatpush1.msra.mxu0 %v650
    %687 = vmatprep.subr.mxu0 0.0
    %688 = vmatpush1.msra.mxu0 0.0
    %689 = vmatprep.subr.mxu0 0.0
    %690 = vmatpush1.msra.mxu0 0.0
    %691 = vmatprep.subr.mxu0 0.0
    %692 = vmatpush1.msra.mxu0 0.0
    %693 = vmatprep.subr.mxu0 0.0
    %694 = vmatpush1.msra.mxu0 0.0
    %695 = vmatprep.subr.mxu0 0.0
    %696 = vmatpush1.msra.mxu0 0.0
    %697 = vmatprep.subr.mxu0 0.0
    %698 = vmatpush1.msra.mxu0 0.0
    %699 = vmatprep.subr.mxu0 0.0
    %700 = vmatpush1.msra.mxu0 0.0
    %701 = vmatprep.subr.mxu0 0.0
    %702 = vmatpush1.msra.mxu0 0.0
    %703 = vmatprep.subr.mxu0 0.0
    %704 = vmatpush1.msra.mxu0 0.0
    %705 = vmatprep.subr.mxu0 0.0
    %706 = vmatpush1.msra.mxu0 0.0
    %707 = vmatprep.subr.mxu0 0.0
    %708 = vmatpush1.msra.mxu0 0.0
    %709 = vmatprep.subr.mxu0 0.0
    %710 = vmatpush1.msra.mxu0 0.0
    %711 = vmatprep.subr.mxu0 0.0
    %712 = vmatpush1.msra.mxu0 0.0
    %713 = vmatprep.subr.mxu0 0.0
    %714 = vmatpush1.msra.mxu0 0.0
    %715 = vmatprep.subr.mxu0 0.0
    %716 = vmatpush1.msra.mxu0 0.0
    %717 = vmatprep.subr.mxu0 0.0
    %718 = vmatpush1.msra.mxu0 0.0
    %719 = vmatprep.subr.mxu0 0.0
    %720 = vmatpush1.msra.mxu0 0.0
    %721 = vmatprep.subr.mxu0 0.0
    %722 = vmatpush1.msra.mxu0 0.0
    %723 = vmatprep.subr.mxu0 0.0
    %724 = vmatpush1.msra.mxu0 0.0
    %725 = vmatprep.subr.mxu0 0.0
    %726 = vmatpush1.msra.mxu0 0.0
    %727 = vmatprep.subr.mxu0 0.0
    %728 = vmatpush1.msra.mxu0 0.0
    %729 = vmatprep.subr.mxu0 0.0
    %730 = vmatpush1.msra.mxu0 0.0
    %731 = vmatprep.subr.mxu0 0.0
    %732 = vmatpush1.msra.mxu0 0.0
    %733 = vmatprep.subr.mxu0 0.0
    %734 = vmatpush1.msra.mxu0 0.0
    %735 = vmatprep.subr.mxu0 0.0
    %736 = vmatpush1.msra.mxu0 0.0
    %737 = vmatprep.subr.mxu0 0.0
    %738 = vmatpush1.msra.mxu0 0.0
    %739 = vmatprep.subr.mxu0 0.0
    %740 = vmatpush1.msra.mxu0 0.0
    %741 = vmatprep.subr.mxu0 0.0
    %742 = vmatpush1.msra.mxu0 0.0
    %743 = vmatprep.mubr.f32.mxu0 0.0
    %744 = vmatmul.mubr.f32.gmra.mrb[0].mxu0 %v668
    %v745 = vpop.f32.mrb[0].mxu0
    %v746 = vadd.f32 %v653, %v745
    %v747 = vpop.f32.mrb[0].mxu0
    %748 = vmatprep.mubr.f32.mxu0 0.0
    %749 = vmatmul.mubr.f32.gmra.mrb[0].mxu0 %v671
    %v750 = vpop.f32.mrb[0].mxu0
    %v751 = vadd.f32 %v657, %v750
    %v752 = vpop.f32.mrb[0].mxu0
    %753 = vmatprep.mubr.f32.mxu0 0.0
    %754 = vmatmul.mubr.f32.gmra.mrb[0].mxu0 %v674
    %v755 = vpop.f32.mrb[0].mxu0
    %v756 = vadd.f32 %v661, %v755
    %v757 = vpop.f32.mrb[0].mxu0
    %758 = vmatprep.mubr.f32.mxu0 0.0
    %759 = vmatmul.mubr.f32.gmra.mrb[0].mxu0 %v677
    %v760 = vpop.f32.mrb[0].mxu0
    %v761 = vadd.f32 %v665, %v760
    %v762 = vpop.f32.mrb[0].mxu0
    %763 = vdwg.mxu0
    %765 = vset.pattern.permute.xlu0 0
    %766 = vperm.xlu0 %765, %v746
    %v767 = vpop.permute.xlu0 %766
    %770 = vset.pattern.permute.xlu0 0
    %771 = vperm.xlu0 %770, %v751
    %v772 = vpop.permute.xlu0 %771
    %775 = vset.pattern.permute.xlu0 0
    %776 = vperm.xlu0 %775, %v756
    %v777 = vpop.permute.xlu0 %776
    %780 = vset.pattern.permute.xlu0 0
    %781 = vperm.xlu0 %780, %v761
    %v782 = vpop.permute.xlu0 %781
    %v784 = vmul.f32 %v767, %v71
    %v785 = vmul.f32 %v772, %v71
    %v786 = vmul.f32 %v777, %v71
    %v787 = vmul.f32 %v782, %v71
    %v788 = vadd.f32 %v784, 0.0
    %v789 = vadd.f32 %v785, 0.0
    %v790 = vadd.f32 %v786, 0.0
    %v791 = vadd.f32 %v787, 0.0
    %792 = vset.pattern.permute.xlu0 1
    %793 = vperm.xlu0 %792, %v746
    %v794 = vpop.permute.xlu0 %793
    %796 = vset.pattern.permute.xlu0 1
    %797 = vperm.xlu0 %796, %v751
    %v798 = vpop.permute.xlu0 %797
    %800 = vset.pattern.permute.xlu0 1
    %801 = vperm.xlu0 %800, %v756
    %v802 = vpop.permute.xlu0 %801
    %804 = vset.pattern.permute.xlu0 1
    %805 = vperm.xlu0 %804, %v761
    %v806 = vpop.permute.xlu0 %805
    %v808 = vmul.f32 %v794, %v73
    %v809 = vmul.f32 %v798, %v73
    %v810 = vmul.f32 %v802, %v73
    %v811 = vmul.f32 %v806, %v73
    %v812 = vadd.f32 %v788, %v808
    %v813 = vadd.f32 %v789, %v809
    %v814 = vadd.f32 %v790, %v810
    %v815 = vadd.f32 %v791, %v811
    %v816 = vadd.f32 %v596, %v812
    %v817 = vadd.f32 %v598, %v813
    %v818 = vadd.f32 %v600, %v814
    %v819 = vadd.f32 %v602, %v815
    %v820 = vmul.f32 %v816, %v41
    %v821 = vmul.f32 %v817, %v41
    %v822 = vmul.f32 %v818, %v41
    %v823 = vmul.f32 %v819, %v41
    %828 = vrot.lane.b32.xlu0 %v820, 2
    %v829 = vpop.permute.xlu0 %828
    %830 = vrot.lane.b32.xlu0 %v821, 2
    %v831 = vpop.permute.xlu0 %830
    %832 = vrot.lane.b32.xlu0 %v822, 2
    %v833 = vpop.permute.xlu0 %832
    %834 = vrot.lane.b32.xlu0 %v823, 2
    %v835 = vpop.permute.xlu0 %834
    %vm840 = vcmask 15360
    %v841 = vsel %vm840, 0.0, %v829
    %v842 = vsel %vm840, 0.0, %v831
    %v843 = vsel %vm840, 0.0, %v833
    %v844 = vsel %vm840, 0.0, %v835
    %vm845 = vcmask 343040
    %v846 = vsel %vm845, %v841, 0.0
    %v847 = vsel %vm845, %v842, 0.0
    %v848 = vsel %vm845, %v843, 0.0
    %v849 = vsel %vm845, %v844, 0.0
    %854 = vrot.lane.b32.xlu0 %v846, 127
    %v855 = vpop.permute.xlu0 %854
    %856 = vrot.lane.b32.xlu0 %v847, 127
    %v857 = vpop.permute.xlu0 %856
    %858 = vrot.lane.b32.xlu0 %v848, 127
    %v859 = vpop.permute.xlu0 %858
    %860 = vrot.lane.b32.xlu0 %v849, 127
    %v861 = vpop.permute.xlu0 %860
    %866 = vrot.lane.b32.xlu0 %v846, 126
    %v867 = vpop.permute.xlu0 %866
    %868 = vrot.lane.b32.xlu0 %v847, 126
    %v869 = vpop.permute.xlu0 %868
    %870 = vrot.lane.b32.xlu0 %v848, 126
    %v871 = vpop.permute.xlu0 %870
    %872 = vrot.lane.b32.xlu0 %v849, 126
    %v873 = vpop.permute.xlu0 %872
    %878 = vrot.lane.b32.xlu0 %v846, 125
    %v879 = vpop.permute.xlu0 %878
    %880 = vrot.lane.b32.xlu0 %v847, 125
    %v881 = vpop.permute.xlu0 %880
    %882 = vrot.lane.b32.xlu0 %v848, 125
    %v883 = vpop.permute.xlu0 %882
    %884 = vrot.lane.b32.xlu0 %v849, 125
    %v885 = vpop.permute.xlu0 %884
    %890 = vrot.lane.b32.xlu0 %v846, 124
    %v891 = vpop.permute.xlu0 %890
    %892 = vrot.lane.b32.xlu0 %v847, 124
    %v893 = vpop.permute.xlu0 %892
    %894 = vrot.lane.b32.xlu0 %v848, 124
    %v895 = vpop.permute.xlu0 %894
    %896 = vrot.lane.b32.xlu0 %v849, 124
    %v897 = vpop.permute.xlu0 %896
    %v902 = vld [vmem:[%s4] sm:$0xff]
    %v903 = vld [vmem:[%s4 + $0x8] sm:$0xff]
    %v904 = vld [vmem:[%s4 + $0x10] sm:$0xff]
    %v905 = vld [vmem:[%s4 + $0x18] sm:$0xff]
    %v906 = vld [vmem:[%s4 + $0x20] sm:$0xff]
    %v907 = vld [vmem:[%s4 + $0x28] sm:$0xff]
    %v908 = vld [vmem:[%s4 + $0x30] sm:$0xff]
    %v909 = vld [vmem:[%s4 + $0x38] sm:$0xff]
    %910 = vset.pattern.permute.xlu0 3
    %911 = vperm.xlu0 %910, %v74
    %v912 = vpop.permute.xlu0 %911
    %914 = vset.pattern.permute.xlu0 3
    %915 = vperm.xlu0 %914, %v75
    %v916 = vpop.permute.xlu0 %915
    %918 = vset.pattern.permute.xlu0 3
    %919 = vperm.xlu0 %918, %v76
    %v920 = vpop.permute.xlu0 %919
    %922 = vset.pattern.permute.xlu0 3
    %923 = vperm.xlu0 %922, %v77
    %v924 = vpop.permute.xlu0 %923
    %v927 = vsel %vm260, %v903, 0
    %v930 = vsel %vm260, %v905, 0
    %v933 = vsel %vm260, %v907, 0
    %v936 = vsel %vm260, %v909, 0
    %938 = vmatprep.subr.mxu0 0.0
    %939 = vmatpush1.msra.mxu0 %v846
    %940 = vmatprep.subr.mxu0 0.0
    %941 = vmatpush1.msra.mxu0 %v847
    %942 = vmatprep.subr.mxu0 0.0
    %943 = vmatpush1.msra.mxu0 %v848
    %944 = vmatprep.subr.mxu0 0.0
    %945 = vmatpush1.msra.mxu0 %v849
    %946 = vmatprep.subr.mxu0 0.0
    %947 = vmatpush1.msra.mxu0 %v855
    %948 = vmatprep.subr.mxu0 0.0
    %949 = vmatpush1.msra.mxu0 %v857
    %950 = vmatprep.subr.mxu0 0.0
    %951 = vmatpush1.msra.mxu0 %v859
    %952 = vmatprep.subr.mxu0 0.0
    %953 = vmatpush1.msra.mxu0 %v861
    %954 = vmatprep.subr.mxu0 0.0
    %955 = vmatpush1.msra.mxu0 %v867
    %956 = vmatprep.subr.mxu0 0.0
    %957 = vmatpush1.msra.mxu0 %v869
    %958 = vmatprep.subr.mxu0 0.0
    %959 = vmatpush1.msra.mxu0 %v871
    %960 = vmatprep.subr.mxu0 0.0
    %961 = vmatpush1.msra.mxu0 %v873
    %962 = vmatprep.subr.mxu0 0.0
    %963 = vmatpush1.msra.mxu0 %v879
    %964 = vmatprep.subr.mxu0 0.0
    %965 = vmatpush1.msra.mxu0 %v881
    %966 = vmatprep.subr.mxu0 0.0
    %967 = vmatpush1.msra.mxu0 %v883
    %968 = vmatprep.subr.mxu0 0.0
    %969 = vmatpush1.msra.mxu0 %v885
    %970 = vmatprep.subr.mxu0 0.0
    %971 = vmatpush1.msra.mxu0 %v891
    %972 = vmatprep.subr.mxu0 0.0
    %973 = vmatpush1.msra.mxu0 %v893
    %974 = vmatprep.subr.mxu0 0.0
    %975 = vmatpush1.msra.mxu0 %v895
    %976 = vmatprep.subr.mxu0 0.0
    %977 = vmatpush1.msra.mxu0 %v897
    %978 = vmatprep.subr.mxu0 0.0
    %979 = vmatpush1.msra.mxu0 0.0
    %980 = vmatprep.subr.mxu0 0.0
    %981 = vmatpush1.msra.mxu0 0.0
    %982 = vmatprep.subr.mxu0 0.0
    %983 = vmatpush1.msra.mxu0 0.0
    %984 = vmatprep.subr.mxu0 0.0
    %985 = vmatpush1.msra.mxu0 0.0
    %986 = vmatprep.subr.mxu0 0.0
    %987 = vmatpush1.msra.mxu0 0.0
    %988 = vmatprep.subr.mxu0 0.0
    %989 = vmatpush1.msra.mxu0 0.0
    %990 = vmatprep.subr.mxu0 0.0
    %991 = vmatpush1.msra.mxu0 0.0
    %992 = vmatprep.subr.mxu0 0.0
    %993 = vmatpush1.msra.mxu0 0.0
    %994 = vmatprep.subr.mxu0 0.0
    %995 = vmatpush1.msra.mxu0 0.0
    %996 = vmatprep.subr.mxu0 0.0
    %997 = vmatpush1.msra.mxu0 0.0
    %998 = vmatprep.subr.mxu0 0.0
    %999 = vmatpush1.msra.mxu0 0.0
    %1000 = vmatprep.subr.mxu0 0.0
    %1001 = vmatpush1.msra.mxu0 0.0
    %1002 = vmatprep.mubr.f32.mxu0 %v927
    %1003 = vmatmul.mubr.f32.gmra.mrb[0].mxu0 %v902
    %v1004 = vpop.f32.mrb[0].mxu0
    %v1005 = vadd.f32 %v912, %v1004
    %v1006 = vpop.f32.mrb[0].mxu0
    %1007 = vmatprep.mubr.f32.mxu0 %v930
    %1008 = vmatmul.mubr.f32.gmra.mrb[0].mxu0 %v904
    %v1009 = vpop.f32.mrb[0].mxu0
    %v1010 = vadd.f32 %v916, %v1009
    %v1011 = vpop.f32.mrb[0].mxu0
    %1012 = vmatprep.mubr.f32.mxu0 %v933
    %1013 = vmatmul.mubr.f32.gmra.mrb[0].mxu0 %v906
    %v1014 = vpop.f32.mrb[0].mxu0
    %v1015 = vadd.f32 %v920, %v1014
    %v1016 = vpop.f32.mrb[0].mxu0
    %1017 = vmatprep.mubr.f32.mxu0 %v936
    %1018 = vmatmul.mubr.f32.gmra.mrb[0].mxu0 %v908
    %v1019 = vpop.f32.mrb[0].mxu0
    %v1020 = vadd.f32 %v924, %v1019
    %v1021 = vpop.f32.mrb[0].mxu0
    %1022 = vdwg.mxu0
    %v1023 = vmul.f32 %v1005, %v41
    %v1024 = vmul.f32 %v1010, %v41
    %v1025 = vmul.f32 %v1015, %v41
    %v1026 = vmul.f32 %v1020, %v41
    %v1027 = vmul.f32 %v1023, %v71
    %v1028 = vmul.f32 %v1024, %v71
    %v1029 = vmul.f32 %v1025, %v71
    %v1030 = vmul.f32 %v1026, %v71
    %v1031 = vsel %vm215, %v1027, 0.0
    %1032 = vadd.xlane.f32.xlu0 %v1031
    %v1033 = vpop.xlane.xlu0 %1032
    %v1034 = vsel %vm215, %v1028, 0.0
    %1035 = vadd.xlane.f32.xlu0 %v1034
    %v1036 = vpop.xlane.xlu0 %1035
    %v1037 = vsel %vm215, %v1029, 0.0
    %1038 = vadd.xlane.f32.xlu0 %v1037
    %v1039 = vpop.xlane.xlu0 %1038
    %v1040 = vsel %vm215, %v1030, 0.0
    %1041 = vadd.xlane.f32.xlu0 %v1040
    %v1042 = vpop.xlane.xlu0 %1041
    %v1043 = vmul.f32 %v1033, %v71
    %v1044 = vmul.f32 %v1036, %v71
    %v1045 = vmul.f32 %v1039, %v71
    %v1046 = vmul.f32 %v1042, %v71
    %v1047 = vadd.f32 %v1043, 0.0
    %v1048 = vadd.f32 %v1044, 0.0
    %v1049 = vadd.f32 %v1045, 0.0
    %v1050 = vadd.f32 %v1046, 0.0
    %v1051 = vmul.f32 %v1023, %v73
    %v1052 = vmul.f32 %v1024, %v73
    %v1053 = vmul.f32 %v1025, %v73
    %v1054 = vmul.f32 %v1026, %v73
    %v1055 = vsel %vm215, %v1051, 0.0
    %1056 = vadd.xlane.f32.xlu0 %v1055
    %v1057 = vpop.xlane.xlu0 %1056
    %v1058 = vsel %vm215, %v1052, 0.0
    %1059 = vadd.xlane.f32.xlu0 %v1058
    %v1060 = vpop.xlane.xlu0 %1059
    %v1061 = vsel %vm215, %v1053, 0.0
    %1062 = vadd.xlane.f32.xlu0 %v1061
    %v1063 = vpop.xlane.xlu0 %1062
    %v1064 = vsel %vm215, %v1054, 0.0
    %1065 = vadd.xlane.f32.xlu0 %v1064
    %v1066 = vpop.xlane.xlu0 %1065
    %v1067 = vmul.f32 %v1057, %v73
    %v1068 = vmul.f32 %v1060, %v73
    %v1069 = vmul.f32 %v1063, %v73
    %v1070 = vmul.f32 %v1066, %v73
    %v1071 = vadd.f32 %v1047, %v1067
    %v1072 = vadd.f32 %v1048, %v1068
    %v1073 = vadd.f32 %v1049, %v1069
    %v1074 = vadd.f32 %v1050, %v1070
    %1075 = vmatprep.subr.mxu0 0.0
    %1076 = vmatpush1.msra.mxu0 %v1071
    %1077 = vmatprep.subr.mxu0 0.0
    %1078 = vmatpush1.msra.mxu0 %v1072
    %1079 = vmatprep.subr.mxu0 0.0
    %1080 = vmatpush1.msra.mxu0 %v1073
    %1081 = vmatprep.subr.mxu0 0.0
    %1082 = vmatpush1.msra.mxu0 %v1074
    %1083 = vmatprep.subr.mxu0 0.0
    %1084 = vmatpush1.msra.mxu0 0.0
    %1085 = vmatprep.subr.mxu0 0.0
    %1086 = vmatpush1.msra.mxu0 0.0
    %1087 = vmatprep.subr.mxu0 0.0
    %1088 = vmatpush1.msra.mxu0 0.0
    %1089 = vmatprep.subr.mxu0 0.0
    %1090 = vmatpush1.msra.mxu0 0.0
    %1091 = vmatprep.subr.mxu0 0.0
    %1092 = vmatpush1.msra.mxu0 0.0
    %1093 = vmatprep.subr.mxu0 0.0
    %1094 = vmatpush1.msra.mxu0 0.0
    %1095 = vmatprep.subr.mxu0 0.0
    %1096 = vmatpush1.msra.mxu0 0.0
    %1097 = vmatprep.subr.mxu0 0.0
    %1098 = vmatpush1.msra.mxu0 0.0
    %1099 = vmatprep.subr.mxu0 0.0
    %1100 = vmatpush1.msra.mxu0 0.0
    %1101 = vmatprep.subr.mxu0 0.0
    %1102 = vmatpush1.msra.mxu0 0.0
    %1103 = vmatprep.subr.mxu0 0.0
    %1104 = vmatpush1.msra.mxu0 0.0
    %1105 = vmatprep.subr.mxu0 0.0
    %1106 = vmatpush1.msra.mxu0 0.0
    %1107 = vmatprep.subr.mxu0 0.0
    %1108 = vmatpush1.msra.mxu0 0.0
    %1109 = vmatprep.subr.mxu0 0.0
    %1110 = vmatpush1.msra.mxu0 0.0
    %1111 = vmatprep.subr.mxu0 0.0
    %1112 = vmatpush1.msra.mxu0 0.0
    %1113 = vmatprep.subr.mxu0 0.0
    %1114 = vmatpush1.msra.mxu0 0.0
    %1115 = vmatprep.subr.mxu0 0.0
    %1116 = vmatpush1.msra.mxu0 0.0
    %1117 = vmatprep.subr.mxu0 0.0
    %1118 = vmatpush1.msra.mxu0 0.0
    %1119 = vmatprep.subr.mxu0 0.0
    %1120 = vmatpush1.msra.mxu0 0.0
    %1121 = vmatprep.subr.mxu0 0.0
    %1122 = vmatpush1.msra.mxu0 0.0
    %1123 = vmatprep.subr.mxu0 0.0
    %1124 = vmatpush1.msra.mxu0 0.0
    %1125 = vmatprep.subr.mxu0 0.0
    %1126 = vmatpush1.msra.mxu0 0.0
    %1127 = vmatprep.subr.mxu0 0.0
    %1128 = vmatpush1.msra.mxu0 0.0
    %1129 = vmatprep.subr.mxu0 0.0
    %1130 = vmatpush1.msra.mxu0 0.0
    %1131 = vmatprep.subr.mxu0 0.0
    %1132 = vmatpush1.msra.mxu0 0.0
    %1133 = vmatprep.subr.mxu0 0.0
    %1134 = vmatpush1.msra.mxu0 0.0
    %1135 = vmatprep.subr.mxu0 0.0
    %1136 = vmatpush1.msra.mxu0 0.0
    %1137 = vmatprep.subr.mxu0 0.0
    %1138 = vmatpush1.msra.mxu0 0.0
    %1139 = vmatprep.mubr.f32.mxu0 0.0
    %1140 = vmatmul.mubr.f32.gmra.mrb[0].mxu0 %v262
    %v1141 = vpop.f32.mrb[0].mxu0
    %v1142 = vadd.f32 0.0, %v1141
    %v1143 = vpop.f32.mrb[0].mxu0
    %1144 = vmatprep.mubr.f32.mxu0 0.0
    %1145 = vmatmul.mubr.f32.gmra.mrb[0].mxu0 %v265
    %v1146 = vpop.f32.mrb[0].mxu0
    %v1147 = vadd.f32 0.0, %v1146
    %v1148 = vpop.f32.mrb[0].mxu0
    %1149 = vmatprep.mubr.f32.mxu0 0.0
    %1150 = vmatmul.mubr.f32.gmra.mrb[0].mxu0 %v268
    %v1151 = vpop.f32.mrb[0].mxu0
    %v1152 = vadd.f32 0.0, %v1151
    %v1153 = vpop.f32.mrb[0].mxu0
    %1154 = vmatprep.mubr.f32.mxu0 0.0
    %1155 = vmatmul.mubr.f32.gmra.mrb[0].mxu0 %v271
    %v1156 = vpop.f32.mrb[0].mxu0
    %v1157 = vadd.f32 0.0, %v1156
    %v1158 = vpop.f32.mrb[0].mxu0
    %1159 = vdwg.mxu0
    %v1160 = vmul.f32 %v1142, 0.015625
    %v1161 = vmul.f32 %v1147, 0.015625
    %v1162 = vmul.f32 %v1152, 0.015625
    %v1163 = vmul.f32 %v1157, 0.015625
    %v1164 = vsub.f32 %v1005, %v1160
    %v1165 = vsub.f32 %v1010, %v1161
    %v1166 = vsub.f32 %v1015, %v1162
    %v1167 = vsub.f32 %v1020, %v1163
    %v1168 = vmul.f32 %v1164, %v41
    %v1169 = vmul.f32 %v1165, %v41
    %v1170 = vmul.f32 %v1166, %v41
    %v1171 = vmul.f32 %v1167, %v41
    %v1172 = vmul.f32 %v1168, %v1168
    %v1173 = vmul.f32 %v1169, %v1169
    %v1174 = vmul.f32 %v1170, %v1170
    %v1175 = vmul.f32 %v1171, %v1171
    %v1176 = vmul.f32 %v1172, %v71
    %v1177 = vmul.f32 %v1173, %v71
    %v1178 = vmul.f32 %v1174, %v71
    %v1179 = vmul.f32 %v1175, %v71
    %v1180 = vsel %vm215, %v1176, 0.0
    %1181 = vadd.xlane.f32.xlu0 %v1180
    %v1182 = vpop.xlane.xlu0 %1181
    %v1183 = vsel %vm215, %v1177, 0.0
    %1184 = vadd.xlane.f32.xlu0 %v1183
    %v1185 = vpop.xlane.xlu0 %1184
    %v1186 = vsel %vm215, %v1178, 0.0
    %1187 = vadd.xlane.f32.xlu0 %v1186
    %v1188 = vpop.xlane.xlu0 %1187
    %v1189 = vsel %vm215, %v1179, 0.0
    %1190 = vadd.xlane.f32.xlu0 %v1189
    %v1191 = vpop.xlane.xlu0 %1190
    %v1192 = vmul.f32 %v1182, %v71
    %v1193 = vmul.f32 %v1185, %v71
    %v1194 = vmul.f32 %v1188, %v71
    %v1195 = vmul.f32 %v1191, %v71
    %v1196 = vadd.f32 %v1192, 0.0
    %v1197 = vadd.f32 %v1193, 0.0
    %v1198 = vadd.f32 %v1194, 0.0
    %v1199 = vadd.f32 %v1195, 0.0
    %v1200 = vmul.f32 %v1172, %v73
    %v1201 = vmul.f32 %v1173, %v73
    %v1202 = vmul.f32 %v1174, %v73
    %v1203 = vmul.f32 %v1175, %v73
    %v1204 = vsel %vm215, %v1200, 0.0
    %1205 = vadd.xlane.f32.xlu0 %v1204
    %v1206 = vpop.xlane.xlu0 %1205
    %v1207 = vsel %vm215, %v1201, 0.0
    %1208 = vadd.xlane.f32.xlu0 %v1207
    %v1209 = vpop.xlane.xlu0 %1208
    %v1210 = vsel %vm215, %v1202, 0.0
    %1211 = vadd.xlane.f32.xlu0 %v1210
    %v1212 = vpop.xlane.xlu0 %1211
    %v1213 = vsel %vm215, %v1203, 0.0
    %1214 = vadd.xlane.f32.xlu0 %v1213
    %v1215 = vpop.xlane.xlu0 %1214
    %v1216 = vmul.f32 %v1206, %v73
    %v1217 = vmul.f32 %v1209, %v73
    %v1218 = vmul.f32 %v1212, %v73
    %v1219 = vmul.f32 %v1215, %v73
    %v1220 = vadd.f32 %v1196, %v1216
    %v1221 = vadd.f32 %v1197, %v1217
    %v1222 = vadd.f32 %v1198, %v1218
    %v1223 = vadd.f32 %v1199, %v1219
    %1224 = vmatprep.subr.mxu0 0.0
    %1225 = vmatpush1.msra.mxu0 %v1220
    %1226 = vmatprep.subr.mxu0 0.0
    %1227 = vmatpush1.msra.mxu0 %v1221
    %1228 = vmatprep.subr.mxu0 0.0
    %1229 = vmatpush1.msra.mxu0 %v1222
    %1230 = vmatprep.subr.mxu0 0.0
    %1231 = vmatpush1.msra.mxu0 %v1223
    %1232 = vmatprep.subr.mxu0 0.0
    %1233 = vmatpush1.msra.mxu0 0.0
    %1234 = vmatprep.subr.mxu0 0.0
    %1235 = vmatpush1.msra.mxu0 0.0
    %1236 = vmatprep.subr.mxu0 0.0
    %1237 = vmatpush1.msra.mxu0 0.0
    %1238 = vmatprep.subr.mxu0 0.0
    %1239 = vmatpush1.msra.mxu0 0.0
    %1240 = vmatprep.subr.mxu0 0.0
    %1241 = vmatpush1.msra.mxu0 0.0
    %1242 = vmatprep.subr.mxu0 0.0
    %1243 = vmatpush1.msra.mxu0 0.0
    %1244 = vmatprep.subr.mxu0 0.0
    %1245 = vmatpush1.msra.mxu0 0.0
    %1246 = vmatprep.subr.mxu0 0.0
    %1247 = vmatpush1.msra.mxu0 0.0
    %1248 = vmatprep.subr.mxu0 0.0
    %1249 = vmatpush1.msra.mxu0 0.0
    %1250 = vmatprep.subr.mxu0 0.0
    %1251 = vmatpush1.msra.mxu0 0.0
    %1252 = vmatprep.subr.mxu0 0.0
    %1253 = vmatpush1.msra.mxu0 0.0
    %1254 = vmatprep.subr.mxu0 0.0
    %1255 = vmatpush1.msra.mxu0 0.0
    %1256 = vmatprep.subr.mxu0 0.0
    %1257 = vmatpush1.msra.mxu0 0.0
    %1258 = vmatprep.subr.mxu0 0.0
    %1259 = vmatpush1.msra.mxu0 0.0
    %1260 = vmatprep.subr.mxu0 0.0
    %1261 = vmatpush1.msra.mxu0 0.0
    %1262 = vmatprep.subr.mxu0 0.0
    %1263 = vmatpush1.msra.mxu0 0.0
    %1264 = vmatprep.subr.mxu0 0.0
    %1265 = vmatpush1.msra.mxu0 0.0
    %1266 = vmatprep.subr.mxu0 0.0
    %1267 = vmatpush1.msra.mxu0 0.0
    %1268 = vmatprep.subr.mxu0 0.0
    %1269 = vmatpush1.msra.mxu0 0.0
    %1270 = vmatprep.subr.mxu0 0.0
    %1271 = vmatpush1.msra.mxu0 0.0
    %1272 = vmatprep.subr.mxu0 0.0
    %1273 = vmatpush1.msra.mxu0 0.0
    %1274 = vmatprep.subr.mxu0 0.0
    %1275 = vmatpush1.msra.mxu0 0.0
    %1276 = vmatprep.subr.mxu0 0.0
    %1277 = vmatpush1.msra.mxu0 0.0
    %1278 = vmatprep.subr.mxu0 0.0
    %1279 = vmatpush1.msra.mxu0 0.0
    %1280 = vmatprep.subr.mxu0 0.0
    %1281 = vmatpush1.msra.mxu0 0.0
    %1282 = vmatprep.subr.mxu0 0.0
    %1283 = vmatpush1.msra.mxu0 0.0
    %1284 = vmatprep.subr.mxu0 0.0
    %1285 = vmatpush1.msra.mxu0 0.0
    %1286 = vmatprep.subr.mxu0 0.0
    %1287 = vmatpush1.msra.mxu0 0.0
    %1288 = vmatprep.mubr.f32.mxu0 0.0
    %1289 = vmatmul.mubr.f32.gmra.mrb[0].mxu0 %v262
    %v1290 = vpop.f32.mrb[0].mxu0
    %v1291 = vadd.f32 0.0, %v1290
    %v1292 = vpop.f32.mrb[0].mxu0
    %1293 = vmatprep.mubr.f32.mxu0 0.0
    %1294 = vmatmul.mubr.f32.gmra.mrb[0].mxu0 %v265
    %v1295 = vpop.f32.mrb[0].mxu0
    %v1296 = vadd.f32 0.0, %v1295
    %v1297 = vpop.f32.mrb[0].mxu0
    %1298 = vmatprep.mubr.f32.mxu0 0.0
    %1299 = vmatmul.mubr.f32.gmra.mrb[0].mxu0 %v268
    %v1300 = vpop.f32.mrb[0].mxu0
    %v1301 = vadd.f32 0.0, %v1300
    %v1302 = vpop.f32.mrb[0].mxu0
    %1303 = vmatprep.mubr.f32.mxu0 0.0
    %1304 = vmatmul.mubr.f32.gmra.mrb[0].mxu0 %v271
    %v1305 = vpop.f32.mrb[0].mxu0
    %v1306 = vadd.f32 0.0, %v1305
    %v1307 = vpop.f32.mrb[0].mxu0
    %1308 = vdwg.mxu0
    %v1309 = vmul.f32 %v1291, 0.015625
    %v1310 = vmul.f32 %v1296, 0.015625
    %v1311 = vmul.f32 %v1301, 0.015625
    %v1312 = vmul.f32 %v1306, 0.015625
    %v1313 = vadd.f32 %v1309, 1e-05
    %v1314 = vadd.f32 %v1310, 1e-05
    %v1315 = vadd.f32 %v1311, 1e-05
    %v1316 = vadd.f32 %v1312, 1e-05
    %v1317 = vrsqrt.pop %v1313
    %v1318 = vrsqrt.pop %v1314
    %v1319 = vrsqrt.pop %v1315
    %v1320 = vrsqrt.pop %v1316
    %v1321 = vmul.f32 %v1164, %v1317
    %v1322 = vmul.f32 %v1165, %v1318
    %v1323 = vmul.f32 %v1166, %v1319
    %v1324 = vmul.f32 %v1167, %v1320
    %1325 = vset.pattern.permute.xlu0 4
    %1326 = vperm.xlu0 %1325, %v74
    %v1327 = vpop.permute.xlu0 %1326
    %1329 = vset.pattern.permute.xlu0 4
    %1330 = vperm.xlu0 %1329, %v75
    %v1331 = vpop.permute.xlu0 %1330
    %1333 = vset.pattern.permute.xlu0 4
    %1334 = vperm.xlu0 %1333, %v76
    %v1335 = vpop.permute.xlu0 %1334
    %1337 = vset.pattern.permute.xlu0 4
    %1338 = vperm.xlu0 %1337, %v77
    %v1339 = vpop.permute.xlu0 %1338
    %v1341 = vmul.f32 %v1321, %v1327
    %v1342 = vmul.f32 %v1322, %v1331
    %v1343 = vmul.f32 %v1323, %v1335
    %v1344 = vmul.f32 %v1324, %v1339
    %1345 = vset.pattern.permute.xlu0 5
    %1346 = vperm.xlu0 %1345, %v74
    %v1347 = vpop.permute.xlu0 %1346
    %1349 = vset.pattern.permute.xlu0 5
    %1350 = vperm.xlu0 %1349, %v75
    %v1351 = vpop.permute.xlu0 %1350
    %1353 = vset.pattern.permute.xlu0 5
    %1354 = vperm.xlu0 %1353, %v76
    %v1355 = vpop.permute.xlu0 %1354
    %1357 = vset.pattern.permute.xlu0 5
    %1358 = vperm.xlu0 %1357, %v77
    %v1359 = vpop.permute.xlu0 %1358
    %v1361 = vadd.f32 %v1341, %v1347
    %v1362 = vadd.f32 %v1342, %v1351
    %v1363 = vadd.f32 %v1343, %v1355
    %v1364 = vadd.f32 %v1344, %v1359
    %v1365 = vmin.f32 %v1361, 20.0
    %v1366 = vmin.f32 %v1362, 20.0
    %v1367 = vmin.f32 %v1363, 20.0
    %v1368 = vmin.f32 %v1364, 20.0
    %v1369 = vmul.f32 %v1365, 1.442695
    %v1370 = vpow.pop %v1369
    %v1371 = vmul.f32 %v1366, 1.442695
    %v1372 = vpow.pop %v1371
    %v1373 = vmul.f32 %v1367, 1.442695
    %v1374 = vpow.pop %v1373
    %v1375 = vmul.f32 %v1368, 1.442695
    %v1376 = vpow.pop %v1375
    %v1377 = vadd.f32 %v1370, 1.0
    %v1378 = vadd.f32 %v1372, 1.0
    %v1379 = vadd.f32 %v1374, 1.0
    %v1380 = vadd.f32 %v1376, 1.0
    %v1381 = vmul.f32 %v1377, %v1377
    %v1382 = vmul.f32 %v1378, %v1378
    %v1383 = vmul.f32 %v1379, %v1379
    %v1384 = vmul.f32 %v1380, %v1380
    %v1385 = vsub.f32 %v1381, 1.0
    %v1386 = vsub.f32 %v1382, 1.0
    %v1387 = vsub.f32 %v1383, 1.0
    %v1388 = vsub.f32 %v1384, 1.0
    %v1389 = vmul.f32 %v1361, %v1385
    %v1390 = vmul.f32 %v1362, %v1386
    %v1391 = vmul.f32 %v1363, %v1387
    %v1392 = vmul.f32 %v1364, %v1388
    %v1393 = vadd.f32 %v1381, 1.0
    %v1394 = vadd.f32 %v1382, 1.0
    %v1395 = vadd.f32 %v1383, 1.0
    %v1396 = vadd.f32 %v1384, 1.0
    %v1397 = vrcp.pop %v1393
    %v1398 = vmul.f32 %v1389, %v1397
    %v1399 = vrcp.pop %v1394
    %v1400 = vmul.f32 %v1390, %v1399
    %v1401 = vrcp.pop %v1395
    %v1402 = vmul.f32 %v1391, %v1401
    %v1403 = vrcp.pop %v1396
    %v1404 = vmul.f32 %v1392, %v1403
    %v1405 = vld [vmem:[%s6] sm:$0xff]
    %v1406 = vld [vmem:[%s6 + $0x8] sm:$0xff]
    %v1407 = vld [vmem:[%s6 + $0x10] sm:$0xff]
    %v1408 = vld [vmem:[%s6 + $0x18] sm:$0xff]
    %v1409 = vld [vmem:[%s1] sm:$0xf]
    %1410 = vset.pattern.permute.xlu0 7
    %1411 = vperm.xlu0 %1410, %v74
    %v1412 = vpop.permute.xlu0 %1411
    %1414 = vset.pattern.permute.xlu0 7
    %1415 = vperm.xlu0 %1414, %v75
    %v1416 = vpop.permute.xlu0 %1415
    %1418 = vset.pattern.permute.xlu0 7
    %1419 = vperm.xlu0 %1418, %v76
    %v1420 = vpop.permute.xlu0 %1419
    %1422 = vset.pattern.permute.xlu0 7
    %1423 = vperm.xlu0 %1422, %v77
    %v1424 = vpop.permute.xlu0 %1423
    %vm1426 = vcmask 31744
    %v1428 = vsel %vm1426, %v1405, 0
    %v1431 = vsel %vm1426, %v1406, 0
    %v1434 = vsel %vm1426, %v1407, 0
    %v1437 = vsel %vm1426, %v1408, 0
    %v1440 = vsel %vm118, %v1409, 0
    %1442 = vmatprep.subr.mxu0 0.0
    %1443 = vmatpush1.msra.mxu0 %v1440
    %1444 = vmatprep.subr.mxu0 0.0
    %1445 = vmatpush1.msra.mxu0 0.0
    %1446 = vmatprep.subr.mxu0 0.0
    %1447 = vmatpush1.msra.mxu0 0.0
    %1448 = vmatprep.subr.mxu0 0.0
    %1449 = vmatpush1.msra.mxu0 0.0
    %1450 = vmatprep.subr.mxu0 0.0
    %1451 = vmatpush1.msra.mxu0 0.0
    %1452 = vmatprep.subr.mxu0 0.0
    %1453 = vmatpush1.msra.mxu0 0.0
    %1454 = vmatprep.subr.mxu0 0.0
    %1455 = vmatpush1.msra.mxu0 0.0
    %1456 = vmatprep.subr.mxu0 0.0
    %1457 = vmatpush1.msra.mxu0 0.0
    %1458 = vmatprep.subr.mxu0 0.0
    %1459 = vmatpush1.msra.mxu0 0.0
    %1460 = vmatprep.subr.mxu0 0.0
    %1461 = vmatpush1.msra.mxu0 0.0
    %1462 = vmatprep.subr.mxu0 0.0
    %1463 = vmatpush1.msra.mxu0 0.0
    %1464 = vmatprep.subr.mxu0 0.0
    %1465 = vmatpush1.msra.mxu0 0.0
    %1466 = vmatprep.subr.mxu0 0.0
    %1467 = vmatpush1.msra.mxu0 0.0
    %1468 = vmatprep.subr.mxu0 0.0
    %1469 = vmatpush1.msra.mxu0 0.0
    %1470 = vmatprep.subr.mxu0 0.0
    %1471 = vmatpush1.msra.mxu0 0.0
    %1472 = vmatprep.subr.mxu0 0.0
    %1473 = vmatpush1.msra.mxu0 0.0
    %1474 = vmatprep.subr.mxu0 0.0
    %1475 = vmatpush1.msra.mxu0 0.0
    %1476 = vmatprep.subr.mxu0 0.0
    %1477 = vmatpush1.msra.mxu0 0.0
    %1478 = vmatprep.subr.mxu0 0.0
    %1479 = vmatpush1.msra.mxu0 0.0
    %1480 = vmatprep.subr.mxu0 0.0
    %1481 = vmatpush1.msra.mxu0 0.0
    %1482 = vmatprep.subr.mxu0 0.0
    %1483 = vmatpush1.msra.mxu0 0.0
    %1484 = vmatprep.subr.mxu0 0.0
    %1485 = vmatpush1.msra.mxu0 0.0
    %1486 = vmatprep.subr.mxu0 0.0
    %1487 = vmatpush1.msra.mxu0 0.0
    %1488 = vmatprep.subr.mxu0 0.0
    %1489 = vmatpush1.msra.mxu0 0.0
    %1490 = vmatprep.subr.mxu0 0.0
    %1491 = vmatpush1.msra.mxu0 0.0
    %1492 = vmatprep.subr.mxu0 0.0
    %1493 = vmatpush1.msra.mxu0 0.0
    %1494 = vmatprep.subr.mxu0 0.0
    %1495 = vmatpush1.msra.mxu0 0.0
    %1496 = vmatprep.subr.mxu0 0.0
    %1497 = vmatpush1.msra.mxu0 0.0
    %1498 = vmatprep.subr.mxu0 0.0
    %1499 = vmatpush1.msra.mxu0 0.0
    %1500 = vmatprep.subr.mxu0 0.0
    %1501 = vmatpush1.msra.mxu0 0.0
    %1502 = vmatprep.subr.mxu0 0.0
    %1503 = vmatpush1.msra.mxu0 0.0
    %1504 = vmatprep.subr.mxu0 0.0
    %1505 = vmatpush1.msra.mxu0 0.0
    %1506 = vmatprep.mubr.f32.mxu0 0.0
    %1507 = vmatmul.mubr.f32.gmra.mrb[0].mxu0 %v1428
    %v1508 = vpop.f32.mrb[0].mxu0
    %v1509 = vadd.f32 %v1412, %v1508
    %v1510 = vpop.f32.mrb[0].mxu0
    %1511 = vmatprep.mubr.f32.mxu0 0.0
    %1512 = vmatmul.mubr.f32.gmra.mrb[0].mxu0 %v1431
    %v1513 = vpop.f32.mrb[0].mxu0
    %v1514 = vadd.f32 %v1416, %v1513
    %v1515 = vpop.f32.mrb[0].mxu0
    %1516 = vmatprep.mubr.f32.mxu0 0.0
    %1517 = vmatmul.mubr.f32.gmra.mrb[0].mxu0 %v1434
    %v1518 = vpop.f32.mrb[0].mxu0
    %v1519 = vadd.f32 %v1420, %v1518
    %v1520 = vpop.f32.mrb[0].mxu0
    %1521 = vmatprep.mubr.f32.mxu0 0.0
    %1522 = vmatmul.mubr.f32.gmra.mrb[0].mxu0 %v1437
    %v1523 = vpop.f32.mrb[0].mxu0
    %v1524 = vadd.f32 %v1424, %v1523
    %v1525 = vpop.f32.mrb[0].mxu0
    %1526 = vdwg.mxu0
    %v1527 = vadd.f32 %v1398, %v1509
    %v1528 = vadd.f32 %v1400, %v1514
    %v1529 = vadd.f32 %v1402, %v1519
    %v1530 = vadd.f32 %v1404, %v1524
    %1531 = vst.msk [vmem:[#allocation2] sm:$0xff] %vm215, %v1527
    %1532 = vst.msk [vmem:[#allocation2 + $0x8] sm:$0xff] %vm215, %v1528
    %1533 = vst.msk [vmem:[#allocation2 + $0x10] sm:$0xff] %vm215, %v1529
    %1534 = vst.msk [vmem:[#allocation2 + $0x18] sm:$0xff] %vm215, %v1530
    // Predicated region
    $region34: #{tpu_custom_call.1} parent=1 // pred_check
      _
    $region35: #{tpu_custom_call.1} parent=1 // pred_check_branch
      %1536 = sbr.rel (0) target = $region37
    $region36: #{tpu_custom_call.1} parent=1 // pred_region
      %s1538 = ssub.s32 512, 512
      %1539 = vsyncadd [#allocation3], %s1538
      %s1540 = sshll.u32 [#allocation2], 4
      %s1541 = int_to_ptr.vmem [resolvable:$true] %s1540
      %1546 = dma.vmem_to_hbm [thread:$0]  %s1541, 512, %s8, [#allocation3], 128, 128, 8
    $region37: #{tpu_custom_call.1} parent=1 // pred_fallthru
      _
    // Predicated region
    $region38: #{tpu_custom_call.1} parent=1 // pred_check
      _
    $region39: #{tpu_custom_call.1} parent=1 // pred_check_branch
      %1548 = sbr.rel (0) target = $region41
    $region40: #{tpu_custom_call.1} parent=1 // pred_region
      %1549 = dma.done [#allocation3], 512
    $region41: #{tpu_custom_call.1} parent=1 // pred_fallthru
      _
    %1550 = vsyncpa [#allocation3], 1

</llo_original>
